<compile_context>
chip_gen: v7x
topology: tpu7x:2x2x1
jax: 0.10.0
libtpu: 0.0.40
codegen_flags: <defaults>
</compile_context>

<pallas_src>
import functools

import jax
import jax.numpy as jnp
from jax.experimental import pallas as pl
from jax.experimental.pallas import tpu as pltpu

# Layer dimensions of myMLP.
DIMS = [59, 256, 512, 256, 64, 16, 2]
# Padded tail widths (zero-filled, numerically exact).
PADDED_DIMS = [59, 256, 512, 256, 128, 128, 2]

# MACs per batch row with the padded tail widths (for the cost estimate).
_MACS_PER_ROW = sum(PADDED_DIMS[i] * PADDED_DIMS[i + 1]
                    for i in range(len(PADDED_DIMS) - 1))


def _round_up(n, m):
    return (n + m - 1) // m * m


def _choose_tb(batch):
    """Batch tile: big tiles to amortize per-step overhead, but keep >=2 grid
    steps for v7x megacore; multiples of 256 work for every MXU generation."""
    if batch <= 256:
        return max(8, _round_up(batch, 8))
    return min(1024, _round_up(pl.cdiv(batch, 2), 256))


def mlp_kernel(x_ref,
               w1_ref, b1_ref,
               w2_ref, b2_ref,
               w3_ref, b3_ref,
               w4_ref, b4_ref,
               w5_ref, b5_ref,
               w6_ref, b6_ref,
               o_ref):
    """Whole MLP forward for one (TB, 59) batch tile.

    Operands into the MXU are bf16; accumulation, bias add and ReLU are f32.
    """

    def linear_relu(h_bf16, w_ref, b_ref):
        y = jnp.dot(h_bf16, w_ref[...], preferred_element_type=jnp.float32)
        return jnp.maximum(y + b_ref[...], 0.0).astype(jnp.bfloat16)

    h = x_ref[...].astype(jnp.bfloat16)          # in-kernel cast, (TB, 59)
    h = linear_relu(h, w1_ref, b1_ref)           # (TB, 256)
    h = linear_relu(h, w2_ref, b2_ref)           # (TB, 512)
    h = linear_relu(h, w3_ref, b3_ref)           # (TB, 256)
    h = linear_relu(h, w4_ref, b4_ref)           # (TB, 128)  cols 64..127 == 0
    h = linear_relu(h, w5_ref, b5_ref)           # (TB, 128)  cols 16..127 == 0
    y = jnp.dot(h, w6_ref[...], preferred_element_type=jnp.float32) + b6_ref[...]
    o_ref[...] = y                               # (TB, 2) f32, no ReLU


def prepare_params(params):
    """One-time param prep (call OUTSIDE the forward path).

    Pads the tail layers with exact zeros:
      W4: (256, 64)  -> (256, 128)   b4: (1, 64) -> (1, 128)
      W5: (64, 16)   -> (128, 128)   b5: (1, 16) -> (1, 128)
      W6: (16, 2)    -> (128, 2)     b6 unchanged
    and casts weights to bf16 (biases stay f32). Returns a flat list
    [W1, b1, ..., W6, b6].
    """
    def pad_to(a, shape):
        out = jnp.zeros(shape, jnp.float32)
        return out.at[: a.shape[0], : a.shape[1]].set(a)

    (w1, b1), (w2, b2), (w3, b3), (w4, b4), (w5, b5), (w6, b6) = params

    w4 = pad_to(w4, (256, 128)); b4 = pad_to(b4, (1, 128))
    w5 = pad_to(w5, (128, 128)); b5 = pad_to(b5, (1, 128))
    w6 = pad_to(w6, (128, 2))

    flat = []
    for w, b in ((w1, b1), (w2, b2), (w3, b3), (w4, b4), (w5, b5), (w6, b6)):
        flat.append(w.astype(jnp.bfloat16))
        flat.append(b.astype(jnp.float32))
    return flat


@functools.partial(jax.jit, static_argnames=("tb",))
def mlp_forward(x, flat_params, tb=None):
    """x: (B, 59) f32.  flat_params: output of prepare_params().  Returns (B, 2) f32."""
    batch = x.shape[0]
    if tb is None:
        tb = _choose_tb(batch)

    padded_batch = _round_up(batch, tb)
    if padded_batch != batch:
        x = jnp.pad(x, ((0, padded_batch - batch), (0, 0)))
    grid = (padded_batch // tb,)

    # Batch-tiled input/output (last dims = full array dims, so 59 / 2 are legal);
    # weights & biases stay VMEM-resident via constant index maps.
    x_spec = pl.BlockSpec((tb, DIMS[0]), lambda i: (i, 0))
    out_spec = pl.BlockSpec((tb, DIMS[-1]), lambda i: (i, 0))
    param_specs = [pl.BlockSpec(p.shape, lambda i: (0, 0)) for p in flat_params]

    weight_bytes = sum(int(p.size) * p.dtype.itemsize for p in flat_params)
    cost = pl.CostEstimate(
        flops=2 * padded_batch * _MACS_PER_ROW,
        transcendentals=0,
        bytes_accessed=padded_batch * (DIMS[0] * 4 + DIMS[-1] * 4) + weight_bytes,
    )

    out = pl.pallas_call(
        mlp_kernel,
        grid=grid,
        out_shape=jax.ShapeDtypeStruct((padded_batch, DIMS[-1]), jnp.float32),
        in_specs=[x_spec] + param_specs,
        out_specs=out_spec,
        compiler_params=pltpu.CompilerParams(
            dimension_semantics=("parallel",),
            vmem_limit_bytes=32 * 1024 * 1024,
        ),
        cost_estimate=cost,
    )(x, *flat_params)

    if padded_batch != batch:
        out = out[:batch]
    return out


def init_params(key):
    """Deterministic init mimicking torch.nn.Linear's U(-1/sqrt(fan_in), 1/sqrt(fan_in))."""
    params = []
    for i in range(len(DIMS) - 1):
        fan_in, fan_out = DIMS[i], DIMS[i + 1]
        key, kw, kb = jax.random.split(key, 3)
        bound = 1.0 / (fan_in ** 0.5)
        w = jax.random.uniform(kw, (fan_in, fan_out), jnp.float32, -bound, bound)
        b = jax.random.uniform(kb, (1, fan_out), jnp.float32, -bound, bound)
        params.append((w, b))
    return params


def mlp_reference(x, params):
    """Pure-JAX reference using the same bf16-operand / f32-accumulate math."""
    h = x.astype(jnp.bfloat16)
    for i, (w, b) in enumerate(params):
        y = jnp.dot(h, w.astype(jnp.bfloat16),
                    preferred_element_type=jnp.float32) + b
        if i < len(params) - 1:
            h = jnp.maximum(y, 0.0).astype(jnp.bfloat16)
        else:
            h = y
    return h


if __name__ == "__main__":
    key = jax.random.PRNGKey(0)
    key, kx = jax.random.split(key)

    batch = 8
    x = jax.random.normal(kx, (batch, DIMS[0]), jnp.float32)
    params = init_params(key)

    # One-time param prep (padding + bf16 cast), hoisted out of the forward path.
    flat_params = prepare_params(params)
    flat_params = jax.block_until_ready(flat_params)

    out = mlp_forward(x, flat_params)
    out = jax.block_until_ready(out)

    ref = mlp_reference(x, params)
    assert out.shape == (batch, DIMS[-1]), out.shape
    assert jnp.allclose(out, ref, atol=2e-2, rtol=2e-2), (
        f"max abs err = {jnp.max(jnp.abs(out - ref))}"
    )

    print("KERNEL_OK")
</pallas_src>

<mosaic_0001>
module attributes {stable_mosaic.version = 11 : i64} {
  func.func @mlp_kernel(%arg0: i32, %arg1: memref<8x59xf32, #tpu.memory_space<vmem>>, %arg2: memref<59x256xbf16, #tpu.memory_space<vmem>>, %arg3: memref<1x256xf32, #tpu.memory_space<vmem>>, %arg4: memref<256x512xbf16, #tpu.memory_space<vmem>>, %arg5: memref<1x512xf32, #tpu.memory_space<vmem>>, %arg6: memref<512x256xbf16, #tpu.memory_space<vmem>>, %arg7: memref<1x256xf32, #tpu.memory_space<vmem>>, %arg8: memref<256x128xbf16, #tpu.memory_space<vmem>>, %arg9: memref<1x128xf32, #tpu.memory_space<vmem>>, %arg10: memref<128x128xbf16, #tpu.memory_space<vmem>>, %arg11: memref<1x128xf32, #tpu.memory_space<vmem>>, %arg12: memref<128x2xbf16, #tpu.memory_space<vmem>>, %arg13: memref<1x2xf32, #tpu.memory_space<vmem>>, %arg14: memref<8x2xf32, #tpu.memory_space<vmem>>) attributes {dimension_semantics = [#tpu.dimension_semantics<parallel>], iteration_bounds = array<i64: 1>, scalar_prefetch = 0 : i64, scratch_operands = 0 : i64, tpu.core_type = #tpu.core_type<tc>, window_params = [{transform_indices = @transform_0, window_bounds = array<i64: 8, 59>}, {pipeline_mode = #tpu.pipeline_mode<synchronous>, transform_indices = @transform_1, window_bounds = array<i64: 59, 256>}, {pipeline_mode = #tpu.pipeline_mode<synchronous>, transform_indices = @transform_2, window_bounds = array<i64: 1, 256>}, {pipeline_mode = #tpu.pipeline_mode<synchronous>, transform_indices = @transform_3, window_bounds = array<i64: 256, 512>}, {pipeline_mode = #tpu.pipeline_mode<synchronous>, transform_indices = @transform_4, window_bounds = array<i64: 1, 512>}, {pipeline_mode = #tpu.pipeline_mode<synchronous>, transform_indices = @transform_5, window_bounds = array<i64: 512, 256>}, {pipeline_mode = #tpu.pipeline_mode<synchronous>, transform_indices = @transform_6, window_bounds = array<i64: 1, 256>}, {pipeline_mode = #tpu.pipeline_mode<synchronous>, transform_indices = @transform_7, window_bounds = array<i64: 256, 128>}, {pipeline_mode = #tpu.pipeline_mode<synchronous>, transform_indices = @transform_8, window_bounds = array<i64: 1, 128>}, {pipeline_mode = #tpu.pipeline_mode<synchronous>, transform_indices = @transform_9, window_bounds = array<i64: 128, 128>}, {pipeline_mode = #tpu.pipeline_mode<synchronous>, transform_indices = @transform_10, window_bounds = array<i64: 1, 128>}, {pipeline_mode = #tpu.pipeline_mode<synchronous>, transform_indices = @transform_11, window_bounds = array<i64: 128, 2>}, {pipeline_mode = #tpu.pipeline_mode<synchronous>, transform_indices = @transform_12, window_bounds = array<i64: 1, 2>}, {transform_indices = @transform_13, window_bounds = array<i64: 8, 2>}]} {
    %c0 = arith.constant 0 : index
    %c0_0 = arith.constant 0 : index
    %0 = vector.load %arg1[%c0, %c0_0] : memref<8x59xf32, #tpu.memory_space<vmem>>, vector<8x59xf32>
    %1 = arith.truncf %0 : vector<8x59xf32> to vector<8x59xbf16>
    %c0_1 = arith.constant 0 : index
    %c0_2 = arith.constant 0 : index
    %2 = vector.load %arg2[%c0_1, %c0_2] : memref<59x256xbf16, #tpu.memory_space<vmem>>, vector<59x256xbf16>
    %cst = arith.constant dense<0.000000e+00> : vector<8x256xf32>
    %3 = tpu.matmul %1, %2, %cst {dimension_numbers = #tpu.dot_dimension_numbers<[1], [0], [0], [1], [0, 0, 1, 1], [], []>} : vector<8x59xbf16>, vector<59x256xbf16>, vector<8x256xf32> -> vector<8x256xf32>
    %c0_3 = arith.constant 0 : index
    %c0_4 = arith.constant 0 : index
    %4 = vector.load %arg3[%c0_3, %c0_4] : memref<1x256xf32, #tpu.memory_space<vmem>>, vector<1x256xf32>
    %5 = vector.broadcast %4 : vector<1x256xf32> to vector<8x256xf32>
    %6 = arith.addf %3, %5 : vector<8x256xf32>
    %cst_5 = arith.constant 0.000000e+00 : f32
    %7 = vector.broadcast %cst_5 : f32 to vector<8x256xf32>
    %8 = arith.maximumf %6, %7 : vector<8x256xf32>
    %9 = arith.truncf %8 : vector<8x256xf32> to vector<8x256xbf16>
    %c0_6 = arith.constant 0 : index
    %c0_7 = arith.constant 0 : index
    %10 = vector.load %arg4[%c0_6, %c0_7] : memref<256x512xbf16, #tpu.memory_space<vmem>>, vector<256x512xbf16>
    %cst_8 = arith.constant dense<0.000000e+00> : vector<8x512xf32>
    %11 = tpu.matmul %9, %10, %cst_8 {dimension_numbers = #tpu.dot_dimension_numbers<[1], [0], [0], [1], [0, 0, 1, 1], [], []>} : vector<8x256xbf16>, vector<256x512xbf16>, vector<8x512xf32> -> vector<8x512xf32>
    %c0_9 = arith.constant 0 : index
    %c0_10 = arith.constant 0 : index
    %12 = vector.load %arg5[%c0_9, %c0_10] : memref<1x512xf32, #tpu.memory_space<vmem>>, vector<1x512xf32>
    %13 = vector.broadcast %12 : vector<1x512xf32> to vector<8x512xf32>
    %14 = arith.addf %11, %13 : vector<8x512xf32>
    %cst_11 = arith.constant 0.000000e+00 : f32
    %15 = vector.broadcast %cst_11 : f32 to vector<8x512xf32>
    %16 = arith.maximumf %14, %15 : vector<8x512xf32>
    %17 = arith.truncf %16 : vector<8x512xf32> to vector<8x512xbf16>
    %c0_12 = arith.constant 0 : index
    %c0_13 = arith.constant 0 : index
    %18 = vector.load %arg6[%c0_12, %c0_13] : memref<512x256xbf16, #tpu.memory_space<vmem>>, vector<512x256xbf16>
    %cst_14 = arith.constant dense<0.000000e+00> : vector<8x256xf32>
    %19 = tpu.matmul %17, %18, %cst_14 {dimension_numbers = #tpu.dot_dimension_numbers<[1], [0], [0], [1], [0, 0, 1, 1], [], []>} : vector<8x512xbf16>, vector<512x256xbf16>, vector<8x256xf32> -> vector<8x256xf32>
    %c0_15 = arith.constant 0 : index
    %c0_16 = arith.constant 0 : index
    %20 = vector.load %arg7[%c0_15, %c0_16] : memref<1x256xf32, #tpu.memory_space<vmem>>, vector<1x256xf32>
    %21 = vector.broadcast %20 : vector<1x256xf32> to vector<8x256xf32>
    %22 = arith.addf %19, %21 : vector<8x256xf32>
    %cst_17 = arith.constant 0.000000e+00 : f32
    %23 = vector.broadcast %cst_17 : f32 to vector<8x256xf32>
    %24 = arith.maximumf %22, %23 : vector<8x256xf32>
    %25 = arith.truncf %24 : vector<8x256xf32> to vector<8x256xbf16>
    %c0_18 = arith.constant 0 : index
    %c0_19 = arith.constant 0 : index
    %26 = vector.load %arg8[%c0_18, %c0_19] : memref<256x128xbf16, #tpu.memory_space<vmem>>, vector<256x128xbf16>
    %cst_20 = arith.constant dense<0.000000e+00> : vector<8x128xf32>
    %27 = tpu.matmul %25, %26, %cst_20 {dimension_numbers = #tpu.dot_dimension_numbers<[1], [0], [0], [1], [0, 0, 1, 1], [], []>} : vector<8x256xbf16>, vector<256x128xbf16>, vector<8x128xf32> -> vector<8x128xf32>
    %c0_21 = arith.constant 0 : index
    %c0_22 = arith.constant 0 : index
    %28 = vector.load %arg9[%c0_21, %c0_22] : memref<1x128xf32, #tpu.memory_space<vmem>>, vector<1x128xf32>
    %29 = vector.broadcast %28 : vector<1x128xf32> to vector<8x128xf32>
    %30 = arith.addf %27, %29 : vector<8x128xf32>
    %cst_23 = arith.constant 0.000000e+00 : f32
    %31 = vector.broadcast %cst_23 : f32 to vector<8x128xf32>
    %32 = arith.maximumf %30, %31 : vector<8x128xf32>
    %33 = arith.truncf %32 : vector<8x128xf32> to vector<8x128xbf16>
    %c0_24 = arith.constant 0 : index
    %c0_25 = arith.constant 0 : index
    %34 = vector.load %arg10[%c0_24, %c0_25] : memref<128x128xbf16, #tpu.memory_space<vmem>>, vector<128x128xbf16>
    %cst_26 = arith.constant dense<0.000000e+00> : vector<8x128xf32>
    %35 = tpu.matmul %33, %34, %cst_26 {dimension_numbers = #tpu.dot_dimension_numbers<[1], [0], [0], [1], [0, 0, 1, 1], [], []>} : vector<8x128xbf16>, vector<128x128xbf16>, vector<8x128xf32> -> vector<8x128xf32>
    %c0_27 = arith.constant 0 : index
    %c0_28 = arith.constant 0 : index
    %36 = vector.load %arg11[%c0_27, %c0_28] : memref<1x128xf32, #tpu.memory_space<vmem>>, vector<1x128xf32>
    %37 = vector.broadcast %36 : vector<1x128xf32> to vector<8x128xf32>
    %38 = arith.addf %35, %37 : vector<8x128xf32>
    %cst_29 = arith.constant 0.000000e+00 : f32
    %39 = vector.broadcast %cst_29 : f32 to vector<8x128xf32>
    %40 = arith.maximumf %38, %39 : vector<8x128xf32>
    %41 = arith.truncf %40 : vector<8x128xf32> to vector<8x128xbf16>
    %c0_30 = arith.constant 0 : index
    %c0_31 = arith.constant 0 : index
    %42 = vector.load %arg12[%c0_30, %c0_31] : memref<128x2xbf16, #tpu.memory_space<vmem>>, vector<128x2xbf16>
    %cst_32 = arith.constant dense<0.000000e+00> : vector<8x2xf32>
    %43 = tpu.matmul %41, %42, %cst_32 {dimension_numbers = #tpu.dot_dimension_numbers<[1], [0], [0], [1], [0, 0, 1, 1], [], []>} : vector<8x128xbf16>, vector<128x2xbf16>, vector<8x2xf32> -> vector<8x2xf32>
    %c0_33 = arith.constant 0 : index
    %c0_34 = arith.constant 0 : index
    %44 = vector.load %arg13[%c0_33, %c0_34] : memref<1x2xf32, #tpu.memory_space<vmem>>, vector<1x2xf32>
    %45 = vector.broadcast %44 : vector<1x2xf32> to vector<8x2xf32>
    %46 = arith.addf %43, %45 : vector<8x2xf32>
    %c0_35 = arith.constant 0 : index
    %c0_36 = arith.constant 0 : index
    %47 = vector.load %arg14[%c0_35, %c0_36] : memref<8x2xf32, #tpu.memory_space<vmem>>, vector<8x2xf32>
    tpu.vector_store %arg14[%c0_35, %c0_36], %46 {strides = array<i32>} : memref<8x2xf32, #tpu.memory_space<vmem>>, vector<8x2xf32>,
    return
  }
  func.func @transform_0(%arg0: i32) -> (i32, i32) {
    %c0_i32 = arith.constant 0 : i32
    %c0_i32_0 = arith.constant 0 : i32
    return %arg0, %c0_i32 : i32, i32
  }
  func.func @transform_1(%arg0: i32) -> (i32, i32) {
    %c0_i32 = arith.constant 0 : i32
    %c0_i32_0 = arith.constant 0 : i32
    %c0_i32_1 = arith.constant 0 : i32
    return %c0_i32, %c0_i32_0 : i32, i32
  }
  func.func @transform_2(%arg0: i32) -> (i32, i32) {
    %c0_i32 = arith.constant 0 : i32
    %c0_i32_0 = arith.constant 0 : i32
    %c0_i32_1 = arith.constant 0 : i32
    return %c0_i32, %c0_i32_0 : i32, i32
  }
  func.func @transform_3(%arg0: i32) -> (i32, i32) {
    %c0_i32 = arith.constant 0 : i32
    %c0_i32_0 = arith.constant 0 : i32
    %c0_i32_1 = arith.constant 0 : i32
    return %c0_i32, %c0_i32_0 : i32, i32
  }
  func.func @transform_4(%arg0: i32) -> (i32, i32) {
    %c0_i32 = arith.constant 0 : i32
    %c0_i32_0 = arith.constant 0 : i32
    %c0_i32_1 = arith.constant 0 : i32
    return %c0_i32, %c0_i32_0 : i32, i32
  }
  func.func @transform_5(%arg0: i32) -> (i32, i32) {
    %c0_i32 = arith.constant 0 : i32
    %c0_i32_0 = arith.constant 0 : i32
    %c0_i32_1 = arith.constant 0 : i32
    return %c0_i32, %c0_i32_0 : i32, i32
  }
  func.func @transform_6(%arg0: i32) -> (i32, i32) {
    %c0_i32 = arith.constant 0 : i32
    %c0_i32_0 = arith.constant 0 : i32
    %c0_i32_1 = arith.constant 0 : i32
    return %c0_i32, %c0_i32_0 : i32, i32
  }
  func.func @transform_7(%arg0: i32) -> (i32, i32) {
    %c0_i32 = arith.constant 0 : i32
    %c0_i32_0 = arith.constant 0 : i32
    %c0_i32_1 = arith.constant 0 : i32
    return %c0_i32, %c0_i32_0 : i32, i32
  }
  func.func @transform_8(%arg0: i32) -> (i32, i32) {
    %c0_i32 = arith.constant 0 : i32
    %c0_i32_0 = arith.constant 0 : i32
    %c0_i32_1 = arith.constant 0 : i32
    return %c0_i32, %c0_i32_0 : i32, i32
  }
  func.func @transform_9(%arg0: i32) -> (i32, i32) {
    %c0_i32 = arith.constant 0 : i32
    %c0_i32_0 = arith.constant 0 : i32
    %c0_i32_1 = arith.constant 0 : i32
    return %c0_i32, %c0_i32_0 : i32, i32
  }
  func.func @transform_10(%arg0: i32) -> (i32, i32) {
    %c0_i32 = arith.constant 0 : i32
    %c0_i32_0 = arith.constant 0 : i32
    %c0_i32_1 = arith.constant 0 : i32
    return %c0_i32, %c0_i32_0 : i32, i32
  }
  func.func @transform_11(%arg0: i32) -> (i32, i32) {
    %c0_i32 = arith.constant 0 : i32
    %c0_i32_0 = arith.constant 0 : i32
    %c0_i32_1 = arith.constant 0 : i32
    return %c0_i32, %c0_i32_0 : i32, i32
  }
  func.func @transform_12(%arg0: i32) -> (i32, i32) {
    %c0_i32 = arith.constant 0 : i32
    %c0_i32_0 = arith.constant 0 : i32
    %c0_i32_1 = arith.constant 0 : i32
    return %c0_i32, %c0_i32_0 : i32, i32
  }
  func.func @transform_13(%arg0: i32) -> (i32, i32) {
    %c0_i32 = arith.constant 0 : i32
    %c0_i32_0 = arith.constant 0 : i32
    return %arg0, %c0_i32 : i32, i32
  }
}

</mosaic_0001>

<llo_original>
// kernel: mlp_forward.1
$region0: #{mlp_forward.1}
  #allocation0 [shape = 'u32[]', space=smem, size = 0x4, offset = 0x4, fixed_abs, tag = 'smem constant byte address 0x4 - core index']
  #allocation1 [shape = 'u32[144,128]{1,0:T(1,128)}', space=vmem, size = 0x12000, scoped, tag = 'internal scratch']
  %s0 = inlined_call_operand.hbm [shape: f32[8,59], index: 0, kind: input, shape index: {}]
  %s1 = inlined_call_operand.vmem [shape: bf16[59,256], index: 1, kind: input, shape index: {}]
  %s2 = inlined_call_operand.vmem [shape: f32[1,256], index: 2, kind: input, shape index: {}]
  %s3 = inlined_call_operand.hbm [shape: bf16[256,512], index: 3, kind: input, shape index: {}]
  %s4 = inlined_call_operand.vmem [shape: f32[1,512], index: 4, kind: input, shape index: {}]
  %s5 = inlined_call_operand.hbm [shape: bf16[512,256], index: 5, kind: input, shape index: {}]
  %s6 = inlined_call_operand.vmem [shape: f32[1,256], index: 6, kind: input, shape index: {}]
  %s7 = inlined_call_operand.hbm [shape: bf16[256,128], index: 7, kind: input, shape index: {}]
  %s8 = inlined_call_operand.vmem [shape: f32[1,128], index: 8, kind: input, shape index: {}]
  %s9 = inlined_call_operand.hbm [shape: bf16[128,128], index: 9, kind: input, shape index: {}]
  %s10 = inlined_call_operand.vmem [shape: f32[1,128], index: 10, kind: input, shape index: {}]
  %s11 = inlined_call_operand.vmem [shape: bf16[128,2], index: 11, kind: input, shape index: {}]
  %s12 = inlined_call_operand.vmem [shape: f32[1,2], index: 12, kind: input, shape index: {}]
  %s13 = inlined_call_operand.vmem [shape: f32[8,2], index: 13, kind: output, shape index: {}]
  %s14 = sld [smem:[#allocation0]]
  $region82: #{mlp_forward.1} parent=0
    _
  %s16 = ssub.s32 1, %s14
  %s17 = scalar_select 0, %s16, %s14
  $region1: #{mlp_forward.1} parent=0
    #allocation2 [shape = 'u8[4096]{0}', space=vmem, size = 0x1000, scoped, tag = 'input window, operand 0, single buffered']
    #allocation3 [shape = 's32[1]{0}', space=sflag, size = 0x4, scoped, tag = 'scoped memory for mlp_forward.1']
    #allocation4 [shape = 'u8[262144]{0}', space=vmem, size = 0x40000, scoped, tag = 'input window, operand 3, single buffered']
    #allocation5 [shape = 's32[1]{0}', space=sflag, size = 0x4, scoped, tag = 'scoped memory for mlp_forward.1']
    #allocation6 [shape = 'u8[262144]{0}', space=vmem, size = 0x40000, scoped, tag = 'input window, operand 5, single buffered']
    #allocation7 [shape = 'u8[65536]{0}', space=vmem, size = 0x10000, scoped, tag = 'input window, operand 7, single buffered']
    #allocation8 [shape = 's32[1]{0}', space=sflag, size = 0x4, scoped, tag = 'scoped memory for mlp_forward.1']
    #allocation9 [shape = 'u8[32768]{0}', space=vmem, size = 0x8000, scoped, tag = 'input window, operand 9, single buffered']
    %18 = vsyncpa [#allocation3], 0
    %19 = vsyncpa [#allocation5], 0
    %20 = vsyncpa [#allocation8], 0
    // Predicated region
    $region2: #{mlp_forward.1} parent=1 // pred_check
      _
    $region3: #{mlp_forward.1} parent=1 // pred_check_branch
      %22 = sbr.rel (0) target = $region5
    $region4: #{mlp_forward.1} parent=1 // pred_region
      %s24 = ssub.s32 128, 128
      %25 = vsyncadd [#allocation3], %s24
      %s27 = sshll.u32 [#allocation2], 4
      %s28 = int_to_ptr.vmem [resolvable:$true] %s27
      %30 = dma.hbm_to_vmem [thread:$0]  %s0, 128, %s28, [#allocation3]
    $region5: #{mlp_forward.1} parent=1 // pred_fallthru
      _
    // Predicated region
    $region6: #{mlp_forward.1} parent=1 // pred_check
      _
    $region7: #{mlp_forward.1} parent=1 // pred_check_branch
      %32 = sbr.rel (0) target = $region9
    $region8: #{mlp_forward.1} parent=1 // pred_region
      _
    $region9: #{mlp_forward.1} parent=1 // pred_fallthru
      _
    // Predicated region
    $region10: #{mlp_forward.1} parent=1 // pred_check
      _
    $region11: #{mlp_forward.1} parent=1 // pred_check_branch
      %34 = sbr.rel (0) target = $region13
    $region12: #{mlp_forward.1} parent=1 // pred_region
      _
    $region13: #{mlp_forward.1} parent=1 // pred_fallthru
      _
    // Predicated region
    $region14: #{mlp_forward.1} parent=1 // pred_check
      _
    $region15: #{mlp_forward.1} parent=1 // pred_check_branch
      %36 = sbr.rel (0) target = $region17
    $region16: #{mlp_forward.1} parent=1 // pred_region
      %s38 = ssub.s32 8192, 8192
      %39 = vsyncadd [#allocation5], %s38
      %s40 = sshll.u32 [#allocation4], 4
      %s41 = int_to_ptr.vmem [resolvable:$true] %s40
      %46 = dma.hbm_to_vmem [thread:$0]  %s3, 8192, %s41, [#allocation5], 256, 256, 16
    $region17: #{mlp_forward.1} parent=1 // pred_fallthru
      _
    // Predicated region
    $region18: #{mlp_forward.1} parent=1 // pred_check
      _
    $region19: #{mlp_forward.1} parent=1 // pred_check_branch
      %48 = sbr.rel (0) target = $region21
    $region20: #{mlp_forward.1} parent=1 // pred_region
      _
    $region21: #{mlp_forward.1} parent=1 // pred_fallthru
      _
    // Predicated region
    $region22: #{mlp_forward.1} parent=1 // pred_check
      _
    $region23: #{mlp_forward.1} parent=1 // pred_check_branch
      %50 = sbr.rel (0) target = $region25
    $region24: #{mlp_forward.1} parent=1 // pred_region
      %s52 = ssub.s32 8192, 8192
      %53 = vsyncadd [#allocation5], %s52
      %s54 = sshll.u32 [#allocation6], 4
      %s55 = int_to_ptr.vmem [resolvable:$true] %s54
      %60 = dma.hbm_to_vmem [thread:$0]  %s5, 8192, %s55, [#allocation5], 128, 128, 8
    $region25: #{mlp_forward.1} parent=1 // pred_fallthru
      _
    // Predicated region
    $region26: #{mlp_forward.1} parent=1 // pred_check
      _
    $region27: #{mlp_forward.1} parent=1 // pred_check_branch
      %62 = sbr.rel (0) target = $region29
    $region28: #{mlp_forward.1} parent=1 // pred_region
      _
    $region29: #{mlp_forward.1} parent=1 // pred_fallthru
      _
    // Predicated region
    $region30: #{mlp_forward.1} parent=1 // pred_check
      _
    $region31: #{mlp_forward.1} parent=1 // pred_check_branch
      %64 = sbr.rel (0) target = $region33
    $region32: #{mlp_forward.1} parent=1 // pred_region
      %s66 = ssub.s32 2048, 2048
      %67 = vsyncadd [#allocation8], %s66
      %s68 = sshll.u32 [#allocation7], 4
      %s69 = int_to_ptr.vmem [resolvable:$true] %s68
      %74 = dma.hbm_to_vmem [thread:$0]  %s7, 2048, %s69, [#allocation8], 64, 64, 4
    $region33: #{mlp_forward.1} parent=1 // pred_fallthru
      _
    // Predicated region
    $region34: #{mlp_forward.1} parent=1 // pred_check
      _
    $region35: #{mlp_forward.1} parent=1 // pred_check_branch
      %76 = sbr.rel (0) target = $region37
    $region36: #{mlp_forward.1} parent=1 // pred_region
      _
    $region37: #{mlp_forward.1} parent=1 // pred_fallthru
      _
    // Predicated region
    $region38: #{mlp_forward.1} parent=1 // pred_check
      _
    $region39: #{mlp_forward.1} parent=1 // pred_check_branch
      %78 = sbr.rel (0) target = $region41
    $region40: #{mlp_forward.1} parent=1 // pred_region
      %s80 = ssub.s32 1024, 1024
      %81 = vsyncadd [#allocation8], %s80
      %s82 = sshll.u32 [#allocation9], 4
      %s83 = int_to_ptr.vmem [resolvable:$true] %s82
      %88 = dma.hbm_to_vmem [thread:$0]  %s9, 1024, %s83, [#allocation8], 64, 64, 4
    $region41: #{mlp_forward.1} parent=1 // pred_fallthru
      _
    // Predicated region
    $region42: #{mlp_forward.1} parent=1 // pred_check
      _
    $region43: #{mlp_forward.1} parent=1 // pred_check_branch
      %90 = sbr.rel (0) target = $region45
    $region44: #{mlp_forward.1} parent=1 // pred_region
      _
    $region45: #{mlp_forward.1} parent=1 // pred_fallthru
      _
    // Predicated region
    $region46: #{mlp_forward.1} parent=1 // pred_check
      _
    $region47: #{mlp_forward.1} parent=1 // pred_check_branch
      %92 = sbr.rel (0) target = $region49
    $region48: #{mlp_forward.1} parent=1 // pred_region
      _
    $region49: #{mlp_forward.1} parent=1 // pred_fallthru
      _
    // Predicated region
    $region50: #{mlp_forward.1} parent=1 // pred_check
      _
    $region51: #{mlp_forward.1} parent=1 // pred_check_branch
      %94 = sbr.rel (0) target = $region53
    $region52: #{mlp_forward.1} parent=1 // pred_region
      _
    $region53: #{mlp_forward.1} parent=1 // pred_fallthru
      _
    // Predicated region
    $region54: #{mlp_forward.1} parent=1 // pred_check
      _
    $region55: #{mlp_forward.1} parent=1 // pred_check_branch
      %96 = sbr.rel (0) target = $region57
    $region56: #{mlp_forward.1} parent=1 // pred_region
      %97 = dma.done [#allocation3], 128
    $region57: #{mlp_forward.1} parent=1 // pred_fallthru
      _
    // Predicated region
    $region58: #{mlp_forward.1} parent=1 // pred_check
      _
    $region59: #{mlp_forward.1} parent=1 // pred_check_branch
      %99 = sbr.rel (0) target = $region61
    $region60: #{mlp_forward.1} parent=1 // pred_region
      %100 = dma.done [#allocation5], 8192
    $region61: #{mlp_forward.1} parent=1 // pred_fallthru
      _
    // Predicated region
    $region62: #{mlp_forward.1} parent=1 // pred_check
      _
    $region63: #{mlp_forward.1} parent=1 // pred_check_branch
      %102 = sbr.rel (0) target = $region65
    $region64: #{mlp_forward.1} parent=1 // pred_region
      %103 = dma.done [#allocation5], 8192
    $region65: #{mlp_forward.1} parent=1 // pred_fallthru
      _
    // Predicated region
    $region66: #{mlp_forward.1} parent=1 // pred_check
      _
    $region67: #{mlp_forward.1} parent=1 // pred_check_branch
      %105 = sbr.rel (0) target = $region69
    $region68: #{mlp_forward.1} parent=1 // pred_region
      %106 = dma.done [#allocation8], 2048
    $region69: #{mlp_forward.1} parent=1 // pred_fallthru
      _
    // Predicated region
    $region70: #{mlp_forward.1} parent=1 // pred_check
      _
    $region71: #{mlp_forward.1} parent=1 // pred_check_branch
      %108 = sbr.rel (0) target = $region73
    $region72: #{mlp_forward.1} parent=1 // pred_region
      %109 = dma.done [#allocation8], 1024
    $region73: #{mlp_forward.1} parent=1 // pred_fallthru
      _
    %v111 = vld [vmem:[#allocation2] sm:$0xff]
    %v112 = vpack.c.bf16 %v111, %v111
    %v113 = vld [vmem:[%s1] sm:$0xff]
    %v114 = vld [vmem:[%s1 + $0x8] sm:$0xff]
    %v115 = vld [vmem:[%s1 + $0x10] sm:$0xff]
    %v116 = vld [vmem:[%s1 + $0x18] sm:$0xff]
    %v117 = vld [vmem:[%s1 + $0x20] sm:$0xff]
    %v118 = vld [vmem:[%s1 + $0x28] sm:$0xff]
    %v119 = vld [vmem:[%s1 + $0x30] sm:$0xff]
    %v120 = vld [vmem:[%s1 + $0x38] sm:$0x33]
    %v121 = vld [vmem:[%s2] sm:$0x3]
    %v123 = vlaneseq
    %v124 = vshrl.u32 %v123, 7
    %v125 = vsub.s32 0, %v124
    %v126 = vrot.slane %v121, %v125
    %v127 = vlaneseq
    %v128 = vshrl.u32 %v127, 7
    %v129 = vsub.s32 1, %v128
    %v130 = vrot.slane %v121, %v129
    %v141 = vunpack.c.l.b16 %v113
    %v142 = vunpack.c.h.b16 %v113
    %v143 = vunpack.c.l.b16 %v114
    %v144 = vunpack.c.h.b16 %v114
    %v145 = vunpack.c.l.b16 %v115
    %v146 = vunpack.c.h.b16 %v115
    %v147 = vunpack.c.l.b16 %v116
    %v148 = vunpack.c.h.b16 %v116
    %v149 = vunpack.c.l.b16 %v117
    %v150 = vunpack.c.h.b16 %v117
    %v151 = vunpack.c.l.b16 %v118
    %v152 = vunpack.c.h.b16 %v118
    %v153 = vunpack.c.l.b16 %v119
    %v154 = vunpack.c.h.b16 %v119
    %v155 = vunpack.c.l.b16 %v120
    %v156 = vunpack.c.h.b16 %v120
    %v157 = vpack.c.b16 %v143, %v141
    %v158 = vpack.c.b16 %v144, %v142
    %v159 = vpack.c.b16 %v147, %v145
    %v160 = vpack.c.b16 %v148, %v146
    %v161 = vpack.c.b16 %v151, %v149
    %v162 = vpack.c.b16 %v152, %v150
    %v163 = vpack.c.b16 %v155, %v153
    %v164 = vpack.c.b16 %v156, %v154
    %vm171 = vcmask 482304
    %v173 = vsel %vm171, %v112, 0
    %vm175 = vcmask 1044480
    %vm176 = vcmask 1045504
    %v177 = vsel %vm175, 4294967295, 65535
    %v178 = vsel %vm176, %v177, 0
    %v180 = vand.u32 %v163, %v178
    %v183 = vand.u32 %v164, %v178
    %185 = vmatprep.subr.bf16.mxu0 %v158
    %186 = vmatpush1.bf16.msra.mxu0 %v157
    %187 = vmatprep.subr.bf16.mxu0 %v160
    %188 = vmatpush1.bf16.msra.mxu0 %v159
    %189 = vmatprep.subr.bf16.mxu0 %v162
    %190 = vmatpush1.bf16.msra.mxu0 %v161
    %191 = vmatprep.subr.bf16.mxu0 %v183
    %192 = vmatpush1.bf16.msra.mxu0 %v180
    %193 = vmatprep.subr.bf16.mxu0 0
    %194 = vmatpush1.bf16.msra.mxu0 0
    %195 = vmatprep.subr.bf16.mxu0 0
    %196 = vmatpush1.bf16.msra.mxu0 0
    %197 = vmatprep.subr.bf16.mxu0 0
    %198 = vmatpush1.bf16.msra.mxu0 0
    %199 = vmatprep.subr.bf16.mxu0 0
    %200 = vmatpush1.bf16.msra.mxu0 0
    %201 = vmatprep.subr.bf16.mxu0 0
    %202 = vmatpush1.bf16.msra.mxu0 0
    %203 = vmatprep.subr.bf16.mxu0 0
    %204 = vmatpush1.bf16.msra.mxu0 0
    %205 = vmatprep.subr.bf16.mxu0 0
    %206 = vmatpush1.bf16.msra.mxu0 0
    %207 = vmatprep.subr.bf16.mxu0 0
    %208 = vmatpush1.bf16.msra.mxu0 0
    %209 = vmatprep.subr.bf16.mxu0 0
    %210 = vmatpush1.bf16.msra.mxu0 0
    %211 = vmatprep.subr.bf16.mxu0 0
    %212 = vmatpush1.bf16.msra.mxu0 0
    %213 = vmatprep.subr.bf16.mxu0 0
    %214 = vmatpush1.bf16.msra.mxu0 0
    %215 = vmatprep.subr.bf16.mxu0 0
    %216 = vmatpush1.bf16.msra.mxu0 0
    %217 = vmatprep.mubr.bf16.mxu0 0
    %218 = vmatmul.mubr.bf16.gmra.mrb[0].mxu0 %v173
    %v219 = vpop.f32.mrb[0].mxu0
    %v220 = vadd.f32 %v126, %v219
    %v221 = vpop.f32.mrb[0].mxu0
    %v222 = vadd.f32 %v130, %v221
    %v223 = vpop.f32.mrb[0].mxu0
    %v224 = vpop.f32.mrb[0].mxu0
    %225 = vdwg.mxu0
    %v226 = vmax.f32 %v220, 0.0
    %v227 = vmax.f32 %v222, 0.0
    %v228 = vpack.c.bf16 %v226, %v226
    %v229 = vpack.c.bf16 %v227, %v227
    %v230 = vld [vmem:[#allocation4] sm:$0xff]
    %v231 = vld [vmem:[#allocation4 + $0x8] sm:$0xff]
    %v232 = vld [vmem:[#allocation4 + $0x10] sm:$0xff]
    %v233 = vld [vmem:[#allocation4 + $0x18] sm:$0xff]
    %v234 = vld [vmem:[#allocation4 + $0x20] sm:$0xff]
    %v235 = vld [vmem:[#allocation4 + $0x28] sm:$0xff]
    %v236 = vld [vmem:[#allocation4 + $0x30] sm:$0xff]
    %v237 = vld [vmem:[#allocation4 + $0x38] sm:$0xff]
    %v238 = vld [vmem:[#allocation4 + $0x40] sm:$0xff]
    %v239 = vld [vmem:[#allocation4 + $0x48] sm:$0xff]
    %v240 = vld [vmem:[#allocation4 + $0x50] sm:$0xff]
    %v241 = vld [vmem:[#allocation4 + $0x58] sm:$0xff]
    %v242 = vld [vmem:[#allocation4 + $0x60] sm:$0xff]
    %v243 = vld [vmem:[#allocation4 + $0x68] sm:$0xff]
    %v244 = vld [vmem:[#allocation4 + $0x70] sm:$0xff]
    %v245 = vld [vmem:[#allocation4 + $0x78] sm:$0xff]
    %v246 = vld [vmem:[#allocation4 + $0x80] sm:$0xff]
    %v247 = vld [vmem:[#allocation4 + $0x88] sm:$0xff]
    %v248 = vld [vmem:[#allocation4 + $0x90] sm:$0xff]
    %v249 = vld [vmem:[#allocation4 + $0x98] sm:$0xff]
    %v250 = vld [vmem:[#allocation4 + $0xa0] sm:$0xff]
    %v251 = vld [vmem:[#allocation4 + $0xa8] sm:$0xff]
    %v252 = vld [vmem:[#allocation4 + $0xb0] sm:$0xff]
    %v253 = vld [vmem:[#allocation4 + $0xb8] sm:$0xff]
    %v254 = vld [vmem:[#allocation4 + $0xc0] sm:$0xff]
    %v255 = vld [vmem:[#allocation4 + $0xc8] sm:$0xff]
    %v256 = vld [vmem:[#allocation4 + $0xd0] sm:$0xff]
    %v257 = vld [vmem:[#allocation4 + $0xd8] sm:$0xff]
    %v258 = vld [vmem:[#allocation4 + $0xe0] sm:$0xff]
    %v259 = vld [vmem:[#allocation4 + $0xe8] sm:$0xff]
    %v260 = vld [vmem:[#allocation4 + $0xf0] sm:$0xff]
    %v261 = vld [vmem:[#allocation4 + $0xf8] sm:$0xff]
    %v262 = vld [vmem:[#allocation4 + $0x100] sm:$0xff]
    %v263 = vld [vmem:[#allocation4 + $0x108] sm:$0xff]
    %v264 = vld [vmem:[#allocation4 + $0x110] sm:$0xff]
    %v265 = vld [vmem:[#allocation4 + $0x118] sm:$0xff]
    %v266 = vld [vmem:[#allocation4 + $0x120] sm:$0xff]
    %v267 = vld [vmem:[#allocation4 + $0x128] sm:$0xff]
    %v268 = vld [vmem:[#allocation4 + $0x130] sm:$0xff]
    %v269 = vld [vmem:[#allocation4 + $0x138] sm:$0xff]
    %v270 = vld [vmem:[#allocation4 + $0x140] sm:$0xff]
    %v271 = vld [vmem:[#allocation4 + $0x148] sm:$0xff]
    %v272 = vld [vmem:[#allocation4 + $0x150] sm:$0xff]
    %v273 = vld [vmem:[#allocation4 + $0x158] sm:$0xff]
    %v274 = vld [vmem:[#allocation4 + $0x160] sm:$0xff]
    %v275 = vld [vmem:[#allocation4 + $0x168] sm:$0xff]
    %v276 = vld [vmem:[#allocation4 + $0x170] sm:$0xff]
    %v277 = vld [vmem:[#allocation4 + $0x178] sm:$0xff]
    %v278 = vld [vmem:[#allocation4 + $0x180] sm:$0xff]
    %v279 = vld [vmem:[#allocation4 + $0x188] sm:$0xff]
    %v280 = vld [vmem:[#allocation4 + $0x190] sm:$0xff]
    %v281 = vld [vmem:[#allocation4 + $0x198] sm:$0xff]
    %v282 = vld [vmem:[#allocation4 + $0x1a0] sm:$0xff]
    %v283 = vld [vmem:[#allocation4 + $0x1a8] sm:$0xff]
    %v284 = vld [vmem:[#allocation4 + $0x1b0] sm:$0xff]
    %v285 = vld [vmem:[#allocation4 + $0x1b8] sm:$0xff]
    %v286 = vld [vmem:[#allocation4 + $0x1c0] sm:$0xff]
    %v287 = vld [vmem:[#allocation4 + $0x1c8] sm:$0xff]
    %v288 = vld [vmem:[#allocation4 + $0x1d0] sm:$0xff]
    %v289 = vld [vmem:[#allocation4 + $0x1d8] sm:$0xff]
    %v290 = vld [vmem:[#allocation4 + $0x1e0] sm:$0xff]
    %v291 = vld [vmem:[#allocation4 + $0x1e8] sm:$0xff]
    %v292 = vld [vmem:[#allocation4 + $0x1f0] sm:$0xff]
    %v293 = vld [vmem:[#allocation4 + $0x1f8] sm:$0xff]
    %v294 = vld [vmem:[%s4] sm:$0xf]
    %v296 = vlaneseq
    %v297 = vshrl.u32 %v296, 7
    %v298 = vsub.s32 0, %v297
    %v299 = vrot.slane %v294, %v298
    %v300 = vlaneseq
    %v301 = vshrl.u32 %v300, 7
    %v302 = vsub.s32 1, %v301
    %v303 = vrot.slane %v294, %v302
    %v304 = vlaneseq
    %v305 = vshrl.u32 %v304, 7
    %v306 = vsub.s32 2, %v305
    %v307 = vrot.slane %v294, %v306
    %v308 = vlaneseq
    %v309 = vshrl.u32 %v308, 7
    %v310 = vsub.s32 3, %v309
    %v311 = vrot.slane %v294, %v310
    %v380 = vunpack.c.l.b16 %v230
    %v381 = vunpack.c.h.b16 %v230
    %v382 = vunpack.c.l.b16 %v231
    %v383 = vunpack.c.h.b16 %v231
    %v384 = vunpack.c.l.b16 %v232
    %v385 = vunpack.c.h.b16 %v232
    %v386 = vunpack.c.l.b16 %v233
    %v387 = vunpack.c.h.b16 %v233
    %v388 = vunpack.c.l.b16 %v234
    %v389 = vunpack.c.h.b16 %v234
    %v390 = vunpack.c.l.b16 %v235
    %v391 = vunpack.c.h.b16 %v235
    %v392 = vunpack.c.l.b16 %v236
    %v393 = vunpack.c.h.b16 %v236
    %v394 = vunpack.c.l.b16 %v237
    %v395 = vunpack.c.h.b16 %v237
    %v396 = vunpack.c.l.b16 %v238
    %v397 = vunpack.c.h.b16 %v238
    %v398 = vunpack.c.l.b16 %v239
    %v399 = vunpack.c.h.b16 %v239
    %v400 = vunpack.c.l.b16 %v240
    %v401 = vunpack.c.h.b16 %v240
    %v402 = vunpack.c.l.b16 %v241
    %v403 = vunpack.c.h.b16 %v241
    %v404 = vunpack.c.l.b16 %v242
    %v405 = vunpack.c.h.b16 %v242
    %v406 = vunpack.c.l.b16 %v243
    %v407 = vunpack.c.h.b16 %v243
    %v408 = vunpack.c.l.b16 %v244
    %v409 = vunpack.c.h.b16 %v244
    %v410 = vunpack.c.l.b16 %v245
    %v411 = vunpack.c.h.b16 %v245
    %v412 = vunpack.c.l.b16 %v246
    %v413 = vunpack.c.h.b16 %v246
    %v414 = vunpack.c.l.b16 %v247
    %v415 = vunpack.c.h.b16 %v247
    %v416 = vunpack.c.l.b16 %v248
    %v417 = vunpack.c.h.b16 %v248
    %v418 = vunpack.c.l.b16 %v249
    %v419 = vunpack.c.h.b16 %v249
    %v420 = vunpack.c.l.b16 %v250
    %v421 = vunpack.c.h.b16 %v250
    %v422 = vunpack.c.l.b16 %v251
    %v423 = vunpack.c.h.b16 %v251
    %v424 = vunpack.c.l.b16 %v252
    %v425 = vunpack.c.h.b16 %v252
    %v426 = vunpack.c.l.b16 %v253
    %v427 = vunpack.c.h.b16 %v253
    %v428 = vunpack.c.l.b16 %v254
    %v429 = vunpack.c.h.b16 %v254
    %v430 = vunpack.c.l.b16 %v255
    %v431 = vunpack.c.h.b16 %v255
    %v432 = vunpack.c.l.b16 %v256
    %v433 = vunpack.c.h.b16 %v256
    %v434 = vunpack.c.l.b16 %v257
    %v435 = vunpack.c.h.b16 %v257
    %v436 = vunpack.c.l.b16 %v258
    %v437 = vunpack.c.h.b16 %v258
    %v438 = vunpack.c.l.b16 %v259
    %v439 = vunpack.c.h.b16 %v259
    %v440 = vunpack.c.l.b16 %v260
    %v441 = vunpack.c.h.b16 %v260
    %v442 = vunpack.c.l.b16 %v261
    %v443 = vunpack.c.h.b16 %v261
    %v444 = vunpack.c.l.b16 %v262
    %v445 = vunpack.c.h.b16 %v262
    %v446 = vunpack.c.l.b16 %v263
    %v447 = vunpack.c.h.b16 %v263
    %v448 = vunpack.c.l.b16 %v264
    %v449 = vunpack.c.h.b16 %v264
    %v450 = vunpack.c.l.b16 %v265
    %v451 = vunpack.c.h.b16 %v265
    %v452 = vunpack.c.l.b16 %v266
    %v453 = vunpack.c.h.b16 %v266
    %v454 = vunpack.c.l.b16 %v267
    %v455 = vunpack.c.h.b16 %v267
    %v456 = vunpack.c.l.b16 %v268
    %v457 = vunpack.c.h.b16 %v268
    %v458 = vunpack.c.l.b16 %v269
    %v459 = vunpack.c.h.b16 %v269
    %v460 = vunpack.c.l.b16 %v270
    %v461 = vunpack.c.h.b16 %v270
    %v462 = vunpack.c.l.b16 %v271
    %v463 = vunpack.c.h.b16 %v271
    %v464 = vunpack.c.l.b16 %v272
    %v465 = vunpack.c.h.b16 %v272
    %v466 = vunpack.c.l.b16 %v273
    %v467 = vunpack.c.h.b16 %v273
    %v468 = vunpack.c.l.b16 %v274
    %v469 = vunpack.c.h.b16 %v274
    %v470 = vunpack.c.l.b16 %v275
    %v471 = vunpack.c.h.b16 %v275
    %v472 = vunpack.c.l.b16 %v276
    %v473 = vunpack.c.h.b16 %v276
    %v474 = vunpack.c.l.b16 %v277
    %v475 = vunpack.c.h.b16 %v277
    %v476 = vunpack.c.l.b16 %v278
    %v477 = vunpack.c.h.b16 %v278
    %v478 = vunpack.c.l.b16 %v279
    %v479 = vunpack.c.h.b16 %v279
    %v480 = vunpack.c.l.b16 %v280
    %v481 = vunpack.c.h.b16 %v280
    %v482 = vunpack.c.l.b16 %v281
    %v483 = vunpack.c.h.b16 %v281
    %v484 = vunpack.c.l.b16 %v282
    %v485 = vunpack.c.h.b16 %v282
    %v486 = vunpack.c.l.b16 %v283
    %v487 = vunpack.c.h.b16 %v283
    %v488 = vunpack.c.l.b16 %v284
    %v489 = vunpack.c.h.b16 %v284
    %v490 = vunpack.c.l.b16 %v285
    %v491 = vunpack.c.h.b16 %v285
    %v492 = vunpack.c.l.b16 %v286
    %v493 = vunpack.c.h.b16 %v286
    %v494 = vunpack.c.l.b16 %v287
    %v495 = vunpack.c.h.b16 %v287
    %v496 = vunpack.c.l.b16 %v288
    %v497 = vunpack.c.h.b16 %v288
    %v498 = vunpack.c.l.b16 %v289
    %v499 = vunpack.c.h.b16 %v289
    %v500 = vunpack.c.l.b16 %v290
    %v501 = vunpack.c.h.b16 %v290
    %v502 = vunpack.c.l.b16 %v291
    %v503 = vunpack.c.h.b16 %v291
    %v504 = vunpack.c.l.b16 %v292
    %v505 = vunpack.c.h.b16 %v292
    %v506 = vunpack.c.l.b16 %v293
    %v507 = vunpack.c.h.b16 %v293
    %v508 = vpack.c.b16 %v384, %v380
    %v509 = vpack.c.b16 %v385, %v381
    %v510 = vpack.c.b16 %v386, %v382
    %v511 = vpack.c.b16 %v387, %v383
    %v512 = vpack.c.b16 %v392, %v388
    %v513 = vpack.c.b16 %v393, %v389
    %v514 = vpack.c.b16 %v394, %v390
    %v515 = vpack.c.b16 %v395, %v391
    %v516 = vpack.c.b16 %v400, %v396
    %v517 = vpack.c.b16 %v401, %v397
    %v518 = vpack.c.b16 %v402, %v398
    %v519 = vpack.c.b16 %v403, %v399
    %v520 = vpack.c.b16 %v408, %v404
    %v521 = vpack.c.b16 %v409, %v405
    %v522 = vpack.c.b16 %v410, %v406
    %v523 = vpack.c.b16 %v411, %v407
    %v524 = vpack.c.b16 %v416, %v412
    %v525 = vpack.c.b16 %v417, %v413
    %v526 = vpack.c.b16 %v418, %v414
    %v527 = vpack.c.b16 %v419, %v415
    %v528 = vpack.c.b16 %v424, %v420
    %v529 = vpack.c.b16 %v425, %v421
    %v530 = vpack.c.b16 %v426, %v422
    %v531 = vpack.c.b16 %v427, %v423
    %v532 = vpack.c.b16 %v432, %v428
    %v533 = vpack.c.b16 %v433, %v429
    %v534 = vpack.c.b16 %v434, %v430
    %v535 = vpack.c.b16 %v435, %v431
    %v536 = vpack.c.b16 %v440, %v436
    %v537 = vpack.c.b16 %v441, %v437
    %v538 = vpack.c.b16 %v442, %v438
    %v539 = vpack.c.b16 %v443, %v439
    %v540 = vpack.c.b16 %v448, %v444
    %v541 = vpack.c.b16 %v449, %v445
    %v542 = vpack.c.b16 %v450, %v446
    %v543 = vpack.c.b16 %v451, %v447
    %v544 = vpack.c.b16 %v456, %v452
    %v545 = vpack.c.b16 %v457, %v453
    %v546 = vpack.c.b16 %v458, %v454
    %v547 = vpack.c.b16 %v459, %v455
    %v548 = vpack.c.b16 %v464, %v460
    %v549 = vpack.c.b16 %v465, %v461
    %v550 = vpack.c.b16 %v466, %v462
    %v551 = vpack.c.b16 %v467, %v463
    %v552 = vpack.c.b16 %v472, %v468
    %v553 = vpack.c.b16 %v473, %v469
    %v554 = vpack.c.b16 %v474, %v470
    %v555 = vpack.c.b16 %v475, %v471
    %v556 = vpack.c.b16 %v480, %v476
    %v557 = vpack.c.b16 %v481, %v477
    %v558 = vpack.c.b16 %v482, %v478
    %v559 = vpack.c.b16 %v483, %v479
    %v560 = vpack.c.b16 %v488, %v484
    %v561 = vpack.c.b16 %v489, %v485
    %v562 = vpack.c.b16 %v490, %v486
    %v563 = vpack.c.b16 %v491, %v487
    %v564 = vpack.c.b16 %v496, %v492
    %v565 = vpack.c.b16 %v497, %v493
    %v566 = vpack.c.b16 %v498, %v494
    %v567 = vpack.c.b16 %v499, %v495
    %v568 = vpack.c.b16 %v504, %v500
    %v569 = vpack.c.b16 %v505, %v501
    %v570 = vpack.c.b16 %v506, %v502
    %v571 = vpack.c.b16 %v507, %v503
    %636 = vmatprep.subr.bf16.mxu0 %v509
    %637 = vmatpush1.bf16.msra.mxu0 %v508
    %638 = vmatprep.subr.bf16.mxu0 %v513
    %639 = vmatpush1.bf16.msra.mxu0 %v512
    %640 = vmatprep.subr.bf16.mxu0 %v517
    %641 = vmatpush1.bf16.msra.mxu0 %v516
    %642 = vmatprep.subr.bf16.mxu0 %v521
    %643 = vmatpush1.bf16.msra.mxu0 %v520
    %644 = vmatprep.subr.bf16.mxu0 %v525
    %645 = vmatpush1.bf16.msra.mxu0 %v524
    %646 = vmatprep.subr.bf16.mxu0 %v529
    %647 = vmatpush1.bf16.msra.mxu0 %v528
    %648 = vmatprep.subr.bf16.mxu0 %v533
    %649 = vmatpush1.bf16.msra.mxu0 %v532
    %650 = vmatprep.subr.bf16.mxu0 %v537
    %651 = vmatpush1.bf16.msra.mxu0 %v536
    %652 = vmatprep.subr.bf16.mxu0 %v541
    %653 = vmatpush1.bf16.msra.mxu0 %v540
    %654 = vmatprep.subr.bf16.mxu0 %v545
    %655 = vmatpush1.bf16.msra.mxu0 %v544
    %656 = vmatprep.subr.bf16.mxu0 %v549
    %657 = vmatpush1.bf16.msra.mxu0 %v548
    %658 = vmatprep.subr.bf16.mxu0 %v553
    %659 = vmatpush1.bf16.msra.mxu0 %v552
    %660 = vmatprep.subr.bf16.mxu0 %v557
    %661 = vmatpush1.bf16.msra.mxu0 %v556
    %662 = vmatprep.subr.bf16.mxu0 %v561
    %663 = vmatpush1.bf16.msra.mxu0 %v560
    %664 = vmatprep.subr.bf16.mxu0 %v565
    %665 = vmatpush1.bf16.msra.mxu0 %v564
    %666 = vmatprep.subr.bf16.mxu0 %v569
    %667 = vmatpush1.bf16.msra.mxu0 %v568
    %668 = vmatprep.mubr.bf16.mxu0 %v229
    %669 = vmatmul.mubr.bf16.gmra.mrb[0].mxu0 %v228
    %v670 = vpop.f32.mrb[0].mxu0
    %v671 = vadd.f32 %v299, %v670
    %v672 = vpop.f32.mrb[0].mxu0
    %v673 = vadd.f32 %v303, %v672
    %v674 = vpop.f32.mrb[0].mxu0
    %v675 = vpop.f32.mrb[0].mxu0
    %676 = vdwg.mxu0
    %677 = vmatprep.subr.bf16.mxu0 %v511
    %678 = vmatpush1.bf16.msra.mxu0 %v510
    %679 = vmatprep.subr.bf16.mxu0 %v515
    %680 = vmatpush1.bf16.msra.mxu0 %v514
    %681 = vmatprep.subr.bf16.mxu0 %v519
    %682 = vmatpush1.bf16.msra.mxu0 %v518
    %683 = vmatprep.subr.bf16.mxu0 %v523
    %684 = vmatpush1.bf16.msra.mxu0 %v522
    %685 = vmatprep.subr.bf16.mxu0 %v527
    %686 = vmatpush1.bf16.msra.mxu0 %v526
    %687 = vmatprep.subr.bf16.mxu0 %v531
    %688 = vmatpush1.bf16.msra.mxu0 %v530
    %689 = vmatprep.subr.bf16.mxu0 %v535
    %690 = vmatpush1.bf16.msra.mxu0 %v534
    %691 = vmatprep.subr.bf16.mxu0 %v539
    %692 = vmatpush1.bf16.msra.mxu0 %v538
    %693 = vmatprep.subr.bf16.mxu0 %v543
    %694 = vmatpush1.bf16.msra.mxu0 %v542
    %695 = vmatprep.subr.bf16.mxu0 %v547
    %696 = vmatpush1.bf16.msra.mxu0 %v546
    %697 = vmatprep.subr.bf16.mxu0 %v551
    %698 = vmatpush1.bf16.msra.mxu0 %v550
    %699 = vmatprep.subr.bf16.mxu0 %v555
    %700 = vmatpush1.bf16.msra.mxu0 %v554
    %701 = vmatprep.subr.bf16.mxu0 %v559
    %702 = vmatpush1.bf16.msra.mxu0 %v558
    %703 = vmatprep.subr.bf16.mxu0 %v563
    %704 = vmatpush1.bf16.msra.mxu0 %v562
    %705 = vmatprep.subr.bf16.mxu0 %v567
    %706 = vmatpush1.bf16.msra.mxu0 %v566
    %707 = vmatprep.subr.bf16.mxu0 %v571
    %708 = vmatpush1.bf16.msra.mxu0 %v570
    %709 = vmatprep.mubr.bf16.mxu0 %v229
    %710 = vmatmul.mubr.bf16.gmra.mrb[0].mxu0 %v228
    %v711 = vpop.f32.mrb[0].mxu0
    %v712 = vadd.f32 %v307, %v711
    %v713 = vpop.f32.mrb[0].mxu0
    %v714 = vadd.f32 %v311, %v713
    %v715 = vpop.f32.mrb[0].mxu0
    %v716 = vpop.f32.mrb[0].mxu0
    %717 = vdwg.mxu0
    %v718 = vmax.f32 %v671, 0.0
    %v719 = vmax.f32 %v673, 0.0
    %v720 = vmax.f32 %v712, 0.0
    %v721 = vmax.f32 %v714, 0.0
    %v722 = vpack.c.bf16 %v718, %v718
    %v723 = vpack.c.bf16 %v719, %v719
    %v724 = vpack.c.bf16 %v720, %v720
    %v725 = vpack.c.bf16 %v721, %v721
    %v726 = vld [vmem:[#allocation6] sm:$0xff]
    %v727 = vld [vmem:[#allocation6 + $0x8] sm:$0xff]
    %v728 = vld [vmem:[#allocation6 + $0x10] sm:$0xff]
    %v729 = vld [vmem:[#allocation6 + $0x18] sm:$0xff]
    %v730 = vld [vmem:[#allocation6 + $0x20] sm:$0xff]
    %v731 = vld [vmem:[#allocation6 + $0x28] sm:$0xff]
    %v732 = vld [vmem:[#allocation6 + $0x30] sm:$0xff]
    %v733 = vld [vmem:[#allocation6 + $0x38] sm:$0xff]
    %v734 = vld [vmem:[#allocation6 + $0x40] sm:$0xff]
    %v735 = vld [vmem:[#allocation6 + $0x48] sm:$0xff]
    %v736 = vld [vmem:[#allocation6 + $0x50] sm:$0xff]
    %v737 = vld [vmem:[#allocation6 + $0x58] sm:$0xff]
    %v738 = vld [vmem:[#allocation6 + $0x60] sm:$0xff]
    %v739 = vld [vmem:[#allocation6 + $0x68] sm:$0xff]
    %v740 = vld [vmem:[#allocation6 + $0x70] sm:$0xff]
    %v741 = vld [vmem:[#allocation6 + $0x78] sm:$0xff]
    %v742 = vld [vmem:[#allocation6 + $0x80] sm:$0xff]
    %v743 = vld [vmem:[#allocation6 + $0x88] sm:$0xff]
    %v744 = vld [vmem:[#allocation6 + $0x90] sm:$0xff]
    %v745 = vld [vmem:[#allocation6 + $0x98] sm:$0xff]
    %v746 = vld [vmem:[#allocation6 + $0xa0] sm:$0xff]
    %v747 = vld [vmem:[#allocation6 + $0xa8] sm:$0xff]
    %v748 = vld [vmem:[#allocation6 + $0xb0] sm:$0xff]
    %v749 = vld [vmem:[#allocation6 + $0xb8] sm:$0xff]
    %v750 = vld [vmem:[#allocation6 + $0xc0] sm:$0xff]
    %v751 = vld [vmem:[#allocation6 + $0xc8] sm:$0xff]
    %v752 = vld [vmem:[#allocation6 + $0xd0] sm:$0xff]
    %v753 = vld [vmem:[#allocation6 + $0xd8] sm:$0xff]
    %v754 = vld [vmem:[#allocation6 + $0xe0] sm:$0xff]
    %v755 = vld [vmem:[#allocation6 + $0xe8] sm:$0xff]
    %v756 = vld [vmem:[#allocation6 + $0xf0] sm:$0xff]
    %v757 = vld [vmem:[#allocation6 + $0xf8] sm:$0xff]
    %v758 = vld [vmem:[#allocation6 + $0x100] sm:$0xff]
    %v759 = vld [vmem:[#allocation6 + $0x108] sm:$0xff]
    %v760 = vld [vmem:[#allocation6 + $0x110] sm:$0xff]
    %v761 = vld [vmem:[#allocation6 + $0x118] sm:$0xff]
    %v762 = vld [vmem:[#allocation6 + $0x120] sm:$0xff]
    %v763 = vld [vmem:[#allocation6 + $0x128] sm:$0xff]
    %v764 = vld [vmem:[#allocation6 + $0x130] sm:$0xff]
    %v765 = vld [vmem:[#allocation6 + $0x138] sm:$0xff]
    %v766 = vld [vmem:[#allocation6 + $0x140] sm:$0xff]
    %v767 = vld [vmem:[#allocation6 + $0x148] sm:$0xff]
    %v768 = vld [vmem:[#allocation6 + $0x150] sm:$0xff]
    %v769 = vld [vmem:[#allocation6 + $0x158] sm:$0xff]
    %v770 = vld [vmem:[#allocation6 + $0x160] sm:$0xff]
    %v771 = vld [vmem:[#allocation6 + $0x168] sm:$0xff]
    %v772 = vld [vmem:[#allocation6 + $0x170] sm:$0xff]
    %v773 = vld [vmem:[#allocation6 + $0x178] sm:$0xff]
    %v774 = vld [vmem:[#allocation6 + $0x180] sm:$0xff]
    %v775 = vld [vmem:[#allocation6 + $0x188] sm:$0xff]
    %v776 = vld [vmem:[#allocation6 + $0x190] sm:$0xff]
    %v777 = vld [vmem:[#allocation6 + $0x198] sm:$0xff]
    %v778 = vld [vmem:[#allocation6 + $0x1a0] sm:$0xff]
    %v779 = vld [vmem:[#allocation6 + $0x1a8] sm:$0xff]
    %v780 = vld [vmem:[#allocation6 + $0x1b0] sm:$0xff]
    %v781 = vld [vmem:[#allocation6 + $0x1b8] sm:$0xff]
    %v782 = vld [vmem:[#allocation6 + $0x1c0] sm:$0xff]
    %v783 = vld [vmem:[#allocation6 + $0x1c8] sm:$0xff]
    %v784 = vld [vmem:[#allocation6 + $0x1d0] sm:$0xff]
    %v785 = vld [vmem:[#allocation6 + $0x1d8] sm:$0xff]
    %v786 = vld [vmem:[#allocation6 + $0x1e0] sm:$0xff]
    %v787 = vld [vmem:[#allocation6 + $0x1e8] sm:$0xff]
    %v788 = vld [vmem:[#allocation6 + $0x1f0] sm:$0xff]
    %v789 = vld [vmem:[#allocation6 + $0x1f8] sm:$0xff]
    %v790 = vld [vmem:[%s6] sm:$0x3]
    %v792 = vlaneseq
    %v793 = vshrl.u32 %v792, 7
    %v794 = vsub.s32 0, %v793
    %v795 = vrot.slane %v790, %v794
    %v796 = vlaneseq
    %v797 = vshrl.u32 %v796, 7
    %v798 = vsub.s32 1, %v797
    %v799 = vrot.slane %v790, %v798
    %v866 = vunpack.c.l.b16 %v726
    %v867 = vunpack.c.h.b16 %v726
    %v868 = vunpack.c.l.b16 %v727
    %v869 = vunpack.c.h.b16 %v727
    %v870 = vunpack.c.l.b16 %v728
    %v871 = vunpack.c.h.b16 %v728
    %v872 = vunpack.c.l.b16 %v729
    %v873 = vunpack.c.h.b16 %v729
    %v874 = vunpack.c.l.b16 %v730
    %v875 = vunpack.c.h.b16 %v730
    %v876 = vunpack.c.l.b16 %v731
    %v877 = vunpack.c.h.b16 %v731
    %v878 = vunpack.c.l.b16 %v732
    %v879 = vunpack.c.h.b16 %v732
    %v880 = vunpack.c.l.b16 %v733
    %v881 = vunpack.c.h.b16 %v733
    %v882 = vunpack.c.l.b16 %v734
    %v883 = vunpack.c.h.b16 %v734
    %v884 = vunpack.c.l.b16 %v735
    %v885 = vunpack.c.h.b16 %v735
    %v886 = vunpack.c.l.b16 %v736
    %v887 = vunpack.c.h.b16 %v736
    %v888 = vunpack.c.l.b16 %v737
    %v889 = vunpack.c.h.b16 %v737
    %v890 = vunpack.c.l.b16 %v738
    %v891 = vunpack.c.h.b16 %v738
    %v892 = vunpack.c.l.b16 %v739
    %v893 = vunpack.c.h.b16 %v739
    %v894 = vunpack.c.l.b16 %v740
    %v895 = vunpack.c.h.b16 %v740
    %v896 = vunpack.c.l.b16 %v741
    %v897 = vunpack.c.h.b16 %v741
    %v898 = vunpack.c.l.b16 %v742
    %v899 = vunpack.c.h.b16 %v742
    %v900 = vunpack.c.l.b16 %v743
    %v901 = vunpack.c.h.b16 %v743
    %v902 = vunpack.c.l.b16 %v744
    %v903 = vunpack.c.h.b16 %v744
    %v904 = vunpack.c.l.b16 %v745
    %v905 = vunpack.c.h.b16 %v745
    %v906 = vunpack.c.l.b16 %v746
    %v907 = vunpack.c.h.b16 %v746
    %v908 = vunpack.c.l.b16 %v747
    %v909 = vunpack.c.h.b16 %v747
    %v910 = vunpack.c.l.b16 %v748
    %v911 = vunpack.c.h.b16 %v748
    %v912 = vunpack.c.l.b16 %v749
    %v913 = vunpack.c.h.b16 %v749
    %v914 = vunpack.c.l.b16 %v750
    %v915 = vunpack.c.h.b16 %v750
    %v916 = vunpack.c.l.b16 %v751
    %v917 = vunpack.c.h.b16 %v751
    %v918 = vunpack.c.l.b16 %v752
    %v919 = vunpack.c.h.b16 %v752
    %v920 = vunpack.c.l.b16 %v753
    %v921 = vunpack.c.h.b16 %v753
    %v922 = vunpack.c.l.b16 %v754
    %v923 = vunpack.c.h.b16 %v754
    %v924 = vunpack.c.l.b16 %v755
    %v925 = vunpack.c.h.b16 %v755
    %v926 = vunpack.c.l.b16 %v756
    %v927 = vunpack.c.h.b16 %v756
    %v928 = vunpack.c.l.b16 %v757
    %v929 = vunpack.c.h.b16 %v757
    %v930 = vunpack.c.l.b16 %v758
    %v931 = vunpack.c.h.b16 %v758
    %v932 = vunpack.c.l.b16 %v759
    %v933 = vunpack.c.h.b16 %v759
    %v934 = vunpack.c.l.b16 %v760
    %v935 = vunpack.c.h.b16 %v760
    %v936 = vunpack.c.l.b16 %v761
    %v937 = vunpack.c.h.b16 %v761
    %v938 = vunpack.c.l.b16 %v762
    %v939 = vunpack.c.h.b16 %v762
    %v940 = vunpack.c.l.b16 %v763
    %v941 = vunpack.c.h.b16 %v763
    %v942 = vunpack.c.l.b16 %v764
    %v943 = vunpack.c.h.b16 %v764
    %v944 = vunpack.c.l.b16 %v765
    %v945 = vunpack.c.h.b16 %v765
    %v946 = vunpack.c.l.b16 %v766
    %v947 = vunpack.c.h.b16 %v766
    %v948 = vunpack.c.l.b16 %v767
    %v949 = vunpack.c.h.b16 %v767
    %v950 = vunpack.c.l.b16 %v768
    %v951 = vunpack.c.h.b16 %v768
    %v952 = vunpack.c.l.b16 %v769
    %v953 = vunpack.c.h.b16 %v769
    %v954 = vunpack.c.l.b16 %v770
    %v955 = vunpack.c.h.b16 %v770
    %v956 = vunpack.c.l.b16 %v771
    %v957 = vunpack.c.h.b16 %v771
    %v958 = vunpack.c.l.b16 %v772
    %v959 = vunpack.c.h.b16 %v772
    %v960 = vunpack.c.l.b16 %v773
    %v961 = vunpack.c.h.b16 %v773
    %v962 = vunpack.c.l.b16 %v774
    %v963 = vunpack.c.h.b16 %v774
    %v964 = vunpack.c.l.b16 %v775
    %v965 = vunpack.c.h.b16 %v775
    %v966 = vunpack.c.l.b16 %v776
    %v967 = vunpack.c.h.b16 %v776
    %v968 = vunpack.c.l.b16 %v777
    %v969 = vunpack.c.h.b16 %v777
    %v970 = vunpack.c.l.b16 %v778
    %v971 = vunpack.c.h.b16 %v778
    %v972 = vunpack.c.l.b16 %v779
    %v973 = vunpack.c.h.b16 %v779
    %v974 = vunpack.c.l.b16 %v780
    %v975 = vunpack.c.h.b16 %v780
    %v976 = vunpack.c.l.b16 %v781
    %v977 = vunpack.c.h.b16 %v781
    %v978 = vunpack.c.l.b16 %v782
    %v979 = vunpack.c.h.b16 %v782
    %v980 = vunpack.c.l.b16 %v783
    %v981 = vunpack.c.h.b16 %v783
    %v982 = vunpack.c.l.b16 %v784
    %v983 = vunpack.c.h.b16 %v784
    %v984 = vunpack.c.l.b16 %v785
    %v985 = vunpack.c.h.b16 %v785
    %v986 = vunpack.c.l.b16 %v786
    %v987 = vunpack.c.h.b16 %v786
    %v988 = vunpack.c.l.b16 %v787
    %v989 = vunpack.c.h.b16 %v787
    %v990 = vunpack.c.l.b16 %v788
    %v991 = vunpack.c.h.b16 %v788
    %v992 = vunpack.c.l.b16 %v789
    %v993 = vunpack.c.h.b16 %v789
    %v994 = vpack.c.b16 %v868, %v866
    %v995 = vpack.c.b16 %v869, %v867
    %v996 = vpack.c.b16 %v872, %v870
    %v997 = vpack.c.b16 %v873, %v871
    %v998 = vpack.c.b16 %v876, %v874
    %v999 = vpack.c.b16 %v877, %v875
    %v1000 = vpack.c.b16 %v880, %v878
    %v1001 = vpack.c.b16 %v881, %v879
    %v1002 = vpack.c.b16 %v884, %v882
    %v1003 = vpack.c.b16 %v885, %v883
    %v1004 = vpack.c.b16 %v888, %v886
    %v1005 = vpack.c.b16 %v889, %v887
    %v1006 = vpack.c.b16 %v892, %v890
    %v1007 = vpack.c.b16 %v893, %v891
    %v1008 = vpack.c.b16 %v896, %v894
    %v1009 = vpack.c.b16 %v897, %v895
    %v1010 = vpack.c.b16 %v900, %v898
    %v1011 = vpack.c.b16 %v901, %v899
    %v1012 = vpack.c.b16 %v904, %v902
    %v1013 = vpack.c.b16 %v905, %v903
    %v1014 = vpack.c.b16 %v908, %v906
    %v1015 = vpack.c.b16 %v909, %v907
    %v1016 = vpack.c.b16 %v912, %v910
    %v1017 = vpack.c.b16 %v913, %v911
    %v1018 = vpack.c.b16 %v916, %v914
    %v1019 = vpack.c.b16 %v917, %v915
    %v1020 = vpack.c.b16 %v920, %v918
    %v1021 = vpack.c.b16 %v921, %v919
    %v1022 = vpack.c.b16 %v924, %v922
    %v1023 = vpack.c.b16 %v925, %v923
    %v1024 = vpack.c.b16 %v928, %v926
    %v1025 = vpack.c.b16 %v929, %v927
    %v1026 = vpack.c.b16 %v932, %v930
    %v1027 = vpack.c.b16 %v933, %v931
    %v1028 = vpack.c.b16 %v936, %v934
    %v1029 = vpack.c.b16 %v937, %v935
    %v1030 = vpack.c.b16 %v940, %v938
    %v1031 = vpack.c.b16 %v941, %v939
    %v1032 = vpack.c.b16 %v944, %v942
    %v1033 = vpack.c.b16 %v945, %v943
    %v1034 = vpack.c.b16 %v948, %v946
    %v1035 = vpack.c.b16 %v949, %v947
    %v1036 = vpack.c.b16 %v952, %v950
    %v1037 = vpack.c.b16 %v953, %v951
    %v1038 = vpack.c.b16 %v956, %v954
    %v1039 = vpack.c.b16 %v957, %v955
    %v1040 = vpack.c.b16 %v960, %v958
    %v1041 = vpack.c.b16 %v961, %v959
    %v1042 = vpack.c.b16 %v964, %v962
    %v1043 = vpack.c.b16 %v965, %v963
    %v1044 = vpack.c.b16 %v968, %v966
    %v1045 = vpack.c.b16 %v969, %v967
    %v1046 = vpack.c.b16 %v972, %v970
    %v1047 = vpack.c.b16 %v973, %v971
    %v1048 = vpack.c.b16 %v976, %v974
    %v1049 = vpack.c.b16 %v977, %v975
    %v1050 = vpack.c.b16 %v980, %v978
    %v1051 = vpack.c.b16 %v981, %v979
    %v1052 = vpack.c.b16 %v984, %v982
    %v1053 = vpack.c.b16 %v985, %v983
    %v1054 = vpack.c.b16 %v988, %v986
    %v1055 = vpack.c.b16 %v989, %v987
    %v1056 = vpack.c.b16 %v992, %v990
    %v1057 = vpack.c.b16 %v993, %v991
    %1122 = vmatprep.subr.bf16.mxu0 %v995
    %1123 = vmatpush1.bf16.msra.mxu0 %v994
    %1124 = vmatprep.subr.bf16.mxu0 %v997
    %1125 = vmatpush1.bf16.msra.mxu0 %v996
    %1126 = vmatprep.subr.bf16.mxu0 %v999
    %1127 = vmatpush1.bf16.msra.mxu0 %v998
    %1128 = vmatprep.subr.bf16.mxu0 %v1001
    %1129 = vmatpush1.bf16.msra.mxu0 %v1000
    %1130 = vmatprep.subr.bf16.mxu0 %v1003
    %1131 = vmatpush1.bf16.msra.mxu0 %v1002
    %1132 = vmatprep.subr.bf16.mxu0 %v1005
    %1133 = vmatpush1.bf16.msra.mxu0 %v1004
    %1134 = vmatprep.subr.bf16.mxu0 %v1007
    %1135 = vmatpush1.bf16.msra.mxu0 %v1006
    %1136 = vmatprep.subr.bf16.mxu0 %v1009
    %1137 = vmatpush1.bf16.msra.mxu0 %v1008
    %1138 = vmatprep.subr.bf16.mxu0 %v1011
    %1139 = vmatpush1.bf16.msra.mxu0 %v1010
    %1140 = vmatprep.subr.bf16.mxu0 %v1013
    %1141 = vmatpush1.bf16.msra.mxu0 %v1012
    %1142 = vmatprep.subr.bf16.mxu0 %v1015
    %1143 = vmatpush1.bf16.msra.mxu0 %v1014
    %1144 = vmatprep.subr.bf16.mxu0 %v1017
    %1145 = vmatpush1.bf16.msra.mxu0 %v1016
    %1146 = vmatprep.subr.bf16.mxu0 %v1019
    %1147 = vmatpush1.bf16.msra.mxu0 %v1018
    %1148 = vmatprep.subr.bf16.mxu0 %v1021
    %1149 = vmatpush1.bf16.msra.mxu0 %v1020
    %1150 = vmatprep.subr.bf16.mxu0 %v1023
    %1151 = vmatpush1.bf16.msra.mxu0 %v1022
    %1152 = vmatprep.subr.bf16.mxu0 %v1025
    %1153 = vmatpush1.bf16.msra.mxu0 %v1024
    %1154 = vmatprep.mubr.bf16.mxu0 %v723
    %1155 = vmatmul.mubr.bf16.gmra.mrb[0].mxu0 %v722
    %v1156 = vpop.f32.mrb[0].mxu0
    %v1157 = vadd.f32 %v795, %v1156
    %v1158 = vpop.f32.mrb[0].mxu0
    %v1159 = vadd.f32 %v799, %v1158
    %v1160 = vpop.f32.mrb[0].mxu0
    %v1161 = vpop.f32.mrb[0].mxu0
    %1162 = vdwg.mxu0
    %1163 = vmatprep.subr.bf16.mxu0 %v1027
    %1164 = vmatpush1.bf16.msra.mxu0 %v1026
    %1165 = vmatprep.subr.bf16.mxu0 %v1029
    %1166 = vmatpush1.bf16.msra.mxu0 %v1028
    %1167 = vmatprep.subr.bf16.mxu0 %v1031
    %1168 = vmatpush1.bf16.msra.mxu0 %v1030
    %1169 = vmatprep.subr.bf16.mxu0 %v1033
    %1170 = vmatpush1.bf16.msra.mxu0 %v1032
    %1171 = vmatprep.subr.bf16.mxu0 %v1035
    %1172 = vmatpush1.bf16.msra.mxu0 %v1034
    %1173 = vmatprep.subr.bf16.mxu0 %v1037
    %1174 = vmatpush1.bf16.msra.mxu0 %v1036
    %1175 = vmatprep.subr.bf16.mxu0 %v1039
    %1176 = vmatpush1.bf16.msra.mxu0 %v1038
    %1177 = vmatprep.subr.bf16.mxu0 %v1041
    %1178 = vmatpush1.bf16.msra.mxu0 %v1040
    %1179 = vmatprep.subr.bf16.mxu0 %v1043
    %1180 = vmatpush1.bf16.msra.mxu0 %v1042
    %1181 = vmatprep.subr.bf16.mxu0 %v1045
    %1182 = vmatpush1.bf16.msra.mxu0 %v1044
    %1183 = vmatprep.subr.bf16.mxu0 %v1047
    %1184 = vmatpush1.bf16.msra.mxu0 %v1046
    %1185 = vmatprep.subr.bf16.mxu0 %v1049
    %1186 = vmatpush1.bf16.msra.mxu0 %v1048
    %1187 = vmatprep.subr.bf16.mxu0 %v1051
    %1188 = vmatpush1.bf16.msra.mxu0 %v1050
    %1189 = vmatprep.subr.bf16.mxu0 %v1053
    %1190 = vmatpush1.bf16.msra.mxu0 %v1052
    %1191 = vmatprep.subr.bf16.mxu0 %v1055
    %1192 = vmatpush1.bf16.msra.mxu0 %v1054
    %1193 = vmatprep.subr.bf16.mxu0 %v1057
    %1194 = vmatpush1.bf16.msra.mxu0 %v1056
    %1195 = vmatprep.mubr.bf16.mxu0 %v725
    %1196 = vmatmul.mubr.bf16.gmra.mrb[0].mxu0 %v724
    %v1197 = vpop.f32.mrb[0].mxu0
    %v1198 = vadd.f32 %v1157, %v1197
    %v1199 = vpop.f32.mrb[0].mxu0
    %v1200 = vadd.f32 %v1159, %v1199
    %v1201 = vpop.f32.mrb[0].mxu0
    %v1202 = vpop.f32.mrb[0].mxu0
    %1203 = vdwg.mxu0
    %v1204 = vmax.f32 %v1198, 0.0
    %v1205 = vmax.f32 %v1200, 0.0
    %v1206 = vpack.c.bf16 %v1204, %v1204
    %v1207 = vpack.c.bf16 %v1205, %v1205
    %v1208 = vld [vmem:[#allocation7] sm:$0xf]
    %v1209 = vld [vmem:[#allocation7 + $0x4] sm:$0xf]
    %v1210 = vld [vmem:[#allocation7 + $0x8] sm:$0xf]
    %v1211 = vld [vmem:[#allocation7 + $0xc] sm:$0xf]
    %v1212 = vld [vmem:[#allocation7 + $0x10] sm:$0xf]
    %v1213 = vld [vmem:[#allocation7 + $0x14] sm:$0xf]
    %v1214 = vld [vmem:[#allocation7 + $0x18] sm:$0xf]
    %v1215 = vld [vmem:[#allocation7 + $0x1c] sm:$0xf]
    %v1216 = vld [vmem:[#allocation7 + $0x20] sm:$0xf]
    %v1217 = vld [vmem:[#allocation7 + $0x24] sm:$0xf]
    %v1218 = vld [vmem:[#allocation7 + $0x28] sm:$0xf]
    %v1219 = vld [vmem:[#allocation7 + $0x2c] sm:$0xf]
    %v1220 = vld [vmem:[#allocation7 + $0x30] sm:$0xf]
    %v1221 = vld [vmem:[#allocation7 + $0x34] sm:$0xf]
    %v1222 = vld [vmem:[#allocation7 + $0x38] sm:$0xf]
    %v1223 = vld [vmem:[#allocation7 + $0x3c] sm:$0xf]
    %v1224 = vld [vmem:[#allocation7 + $0x40] sm:$0xf]
    %v1225 = vld [vmem:[#allocation7 + $0x44] sm:$0xf]
    %v1226 = vld [vmem:[#allocation7 + $0x48] sm:$0xf]
    %v1227 = vld [vmem:[#allocation7 + $0x4c] sm:$0xf]
    %v1228 = vld [vmem:[#allocation7 + $0x50] sm:$0xf]
    %v1229 = vld [vmem:[#allocation7 + $0x54] sm:$0xf]
    %v1230 = vld [vmem:[#allocation7 + $0x58] sm:$0xf]
    %v1231 = vld [vmem:[#allocation7 + $0x5c] sm:$0xf]
    %v1232 = vld [vmem:[#allocation7 + $0x60] sm:$0xf]
    %v1233 = vld [vmem:[#allocation7 + $0x64] sm:$0xf]
    %v1234 = vld [vmem:[#allocation7 + $0x68] sm:$0xf]
    %v1235 = vld [vmem:[#allocation7 + $0x6c] sm:$0xf]
    %v1236 = vld [vmem:[#allocation7 + $0x70] sm:$0xf]
    %v1237 = vld [vmem:[#allocation7 + $0x74] sm:$0xf]
    %v1238 = vld [vmem:[#allocation7 + $0x78] sm:$0xf]
    %v1239 = vld [vmem:[#allocation7 + $0x7c] sm:$0xf]
    %v1240 = vld [vmem:[%s8] sm:$0x1]
    %v1242 = vlaneseq
    %v1243 = vshrl.u32 %v1242, 7
    %v1244 = vsub.s32 0, %v1243
    %v1245 = vrot.slane %v1240, %v1244
    %v1279 = vunpack.c.l.b16 %v1208
    %v1280 = vunpack.c.l.b16 %v1209
    %v1281 = vunpack.c.l.b16 %v1210
    %v1282 = vunpack.c.l.b16 %v1211
    %v1283 = vunpack.c.l.b16 %v1212
    %v1284 = vunpack.c.l.b16 %v1213
    %v1285 = vunpack.c.l.b16 %v1214
    %v1286 = vunpack.c.l.b16 %v1215
    %v1287 = vunpack.c.l.b16 %v1216
    %v1288 = vunpack.c.l.b16 %v1217
    %v1289 = vunpack.c.l.b16 %v1218
    %v1290 = vunpack.c.l.b16 %v1219
    %v1291 = vunpack.c.l.b16 %v1220
    %v1292 = vunpack.c.l.b16 %v1221
    %v1293 = vunpack.c.l.b16 %v1222
    %v1294 = vunpack.c.l.b16 %v1223
    %v1295 = vunpack.c.l.b16 %v1224
    %v1296 = vunpack.c.l.b16 %v1225
    %v1297 = vunpack.c.l.b16 %v1226
    %v1298 = vunpack.c.l.b16 %v1227
    %v1299 = vunpack.c.l.b16 %v1228
    %v1300 = vunpack.c.l.b16 %v1229
    %v1301 = vunpack.c.l.b16 %v1230
    %v1302 = vunpack.c.l.b16 %v1231
    %v1303 = vunpack.c.l.b16 %v1232
    %v1304 = vunpack.c.l.b16 %v1233
    %v1305 = vunpack.c.l.b16 %v1234
    %v1306 = vunpack.c.l.b16 %v1235
    %v1307 = vunpack.c.l.b16 %v1236
    %v1308 = vunpack.c.l.b16 %v1237
    %v1309 = vunpack.c.l.b16 %v1238
    %v1310 = vunpack.c.l.b16 %v1239
    %v1311 = vpack.c.b16 %v1280, %v1279
    %v1312 = vpack.c.b16 %v1282, %v1281
    %v1313 = vpack.c.b16 %v1284, %v1283
    %v1314 = vpack.c.b16 %v1286, %v1285
    %v1315 = vpack.c.b16 %v1288, %v1287
    %v1316 = vpack.c.b16 %v1290, %v1289
    %v1317 = vpack.c.b16 %v1292, %v1291
    %v1318 = vpack.c.b16 %v1294, %v1293
    %v1319 = vpack.c.b16 %v1296, %v1295
    %v1320 = vpack.c.b16 %v1298, %v1297
    %v1321 = vpack.c.b16 %v1300, %v1299
    %v1322 = vpack.c.b16 %v1302, %v1301
    %v1323 = vpack.c.b16 %v1304, %v1303
    %v1324 = vpack.c.b16 %v1306, %v1305
    %v1325 = vpack.c.b16 %v1308, %v1307
    %v1326 = vpack.c.b16 %v1310, %v1309
    %1343 = vmatprep.subr.bf16.mxu0 0
    %1344 = vmatpush1.bf16.msra.mxu0 %v1311
    %1345 = vmatprep.subr.bf16.mxu0 0
    %1346 = vmatpush1.bf16.msra.mxu0 %v1312
    %1347 = vmatprep.subr.bf16.mxu0 0
    %1348 = vmatpush1.bf16.msra.mxu0 %v1313
    %1349 = vmatprep.subr.bf16.mxu0 0
    %1350 = vmatpush1.bf16.msra.mxu0 %v1314
    %1351 = vmatprep.subr.bf16.mxu0 0
    %1352 = vmatpush1.bf16.msra.mxu0 %v1315
    %1353 = vmatprep.subr.bf16.mxu0 0
    %1354 = vmatpush1.bf16.msra.mxu0 %v1316
    %1355 = vmatprep.subr.bf16.mxu0 0
    %1356 = vmatpush1.bf16.msra.mxu0 %v1317
    %1357 = vmatprep.subr.bf16.mxu0 0
    %1358 = vmatpush1.bf16.msra.mxu0 %v1318
    %1359 = vmatprep.subr.bf16.mxu0 0
    %1360 = vmatpush1.bf16.msra.mxu0 %v1319
    %1361 = vmatprep.subr.bf16.mxu0 0
    %1362 = vmatpush1.bf16.msra.mxu0 %v1320
    %1363 = vmatprep.subr.bf16.mxu0 0
    %1364 = vmatpush1.bf16.msra.mxu0 %v1321
    %1365 = vmatprep.subr.bf16.mxu0 0
    %1366 = vmatpush1.bf16.msra.mxu0 %v1322
    %1367 = vmatprep.subr.bf16.mxu0 0
    %1368 = vmatpush1.bf16.msra.mxu0 %v1323
    %1369 = vmatprep.subr.bf16.mxu0 0
    %1370 = vmatpush1.bf16.msra.mxu0 %v1324
    %1371 = vmatprep.subr.bf16.mxu0 0
    %1372 = vmatpush1.bf16.msra.mxu0 %v1325
    %1373 = vmatprep.subr.bf16.mxu0 0
    %1374 = vmatpush1.bf16.msra.mxu0 %v1326
    %1375 = vmatprep.mubr.bf16.mxu0 %v1207
    %1376 = vmatmul.mubr.bf16.gmra.mrb[0].mxu0 %v1206
    %v1377 = vpop.f32.mrb[0].mxu0
    %v1378 = vadd.f32 %v1245, %v1377
    %v1379 = vpop.f32.mrb[0].mxu0
    %v1380 = vpop.f32.mrb[0].mxu0
    %v1381 = vpop.f32.mrb[0].mxu0
    %1382 = vdwg.mxu0
    %v1383 = vmax.f32 %v1378, 0.0
    %v1384 = vpack.c.bf16 %v1383, %v1383
    %v1385 = vld [vmem:[#allocation9] sm:$0xf]
    %v1386 = vld [vmem:[#allocation9 + $0x4] sm:$0xf]
    %v1387 = vld [vmem:[#allocation9 + $0x8] sm:$0xf]
    %v1388 = vld [vmem:[#allocation9 + $0xc] sm:$0xf]
    %v1389 = vld [vmem:[#allocation9 + $0x10] sm:$0xf]
    %v1390 = vld [vmem:[#allocation9 + $0x14] sm:$0xf]
    %v1391 = vld [vmem:[#allocation9 + $0x18] sm:$0xf]
    %v1392 = vld [vmem:[#allocation9 + $0x1c] sm:$0xf]
    %v1393 = vld [vmem:[#allocation9 + $0x20] sm:$0xf]
    %v1394 = vld [vmem:[#allocation9 + $0x24] sm:$0xf]
    %v1395 = vld [vmem:[#allocation9 + $0x28] sm:$0xf]
    %v1396 = vld [vmem:[#allocation9 + $0x2c] sm:$0xf]
    %v1397 = vld [vmem:[#allocation9 + $0x30] sm:$0xf]
    %v1398 = vld [vmem:[#allocation9 + $0x34] sm:$0xf]
    %v1399 = vld [vmem:[#allocation9 + $0x38] sm:$0xf]
    %v1400 = vld [vmem:[#allocation9 + $0x3c] sm:$0xf]
    %v1401 = vld [vmem:[%s10] sm:$0x1]
    %v1403 = vlaneseq
    %v1404 = vshrl.u32 %v1403, 7
    %v1405 = vsub.s32 0, %v1404
    %v1406 = vrot.slane %v1401, %v1405
    %v1424 = vunpack.c.l.b16 %v1385
    %v1425 = vunpack.c.l.b16 %v1386
    %v1426 = vunpack.c.l.b16 %v1387
    %v1427 = vunpack.c.l.b16 %v1388
    %v1428 = vunpack.c.l.b16 %v1389
    %v1429 = vunpack.c.l.b16 %v1390
    %v1430 = vunpack.c.l.b16 %v1391
    %v1431 = vunpack.c.l.b16 %v1392
    %v1432 = vunpack.c.l.b16 %v1393
    %v1433 = vunpack.c.l.b16 %v1394
    %v1434 = vunpack.c.l.b16 %v1395
    %v1435 = vunpack.c.l.b16 %v1396
    %v1436 = vunpack.c.l.b16 %v1397
    %v1437 = vunpack.c.l.b16 %v1398
    %v1438 = vunpack.c.l.b16 %v1399
    %v1439 = vunpack.c.l.b16 %v1400
    %v1440 = vpack.c.b16 %v1425, %v1424
    %v1441 = vpack.c.b16 %v1427, %v1426
    %v1442 = vpack.c.b16 %v1429, %v1428
    %v1443 = vpack.c.b16 %v1431, %v1430
    %v1444 = vpack.c.b16 %v1433, %v1432
    %v1445 = vpack.c.b16 %v1435, %v1434
    %v1446 = vpack.c.b16 %v1437, %v1436
    %v1447 = vpack.c.b16 %v1439, %v1438
    %1456 = vmatprep.subr.bf16.mxu0 0
    %1457 = vmatpush1.bf16.msra.mxu0 %v1440
    %1458 = vmatprep.subr.bf16.mxu0 0
    %1459 = vmatpush1.bf16.msra.mxu0 %v1441
    %1460 = vmatprep.subr.bf16.mxu0 0
    %1461 = vmatpush1.bf16.msra.mxu0 %v1442
    %1462 = vmatprep.subr.bf16.mxu0 0
    %1463 = vmatpush1.bf16.msra.mxu0 %v1443
    %1464 = vmatprep.subr.bf16.mxu0 0
    %1465 = vmatpush1.bf16.msra.mxu0 %v1444
    %1466 = vmatprep.subr.bf16.mxu0 0
    %1467 = vmatpush1.bf16.msra.mxu0 %v1445
    %1468 = vmatprep.subr.bf16.mxu0 0
    %1469 = vmatpush1.bf16.msra.mxu0 %v1446
    %1470 = vmatprep.subr.bf16.mxu0 0
    %1471 = vmatpush1.bf16.msra.mxu0 %v1447
    %1472 = vmatprep.subr.bf16.mxu0 0
    %1473 = vmatpush1.bf16.msra.mxu0 0
    %1474 = vmatprep.subr.bf16.mxu0 0
    %1475 = vmatpush1.bf16.msra.mxu0 0
    %1476 = vmatprep.subr.bf16.mxu0 0
    %1477 = vmatpush1.bf16.msra.mxu0 0
    %1478 = vmatprep.subr.bf16.mxu0 0
    %1479 = vmatpush1.bf16.msra.mxu0 0
    %1480 = vmatprep.subr.bf16.mxu0 0
    %1481 = vmatpush1.bf16.msra.mxu0 0
    %1482 = vmatprep.subr.bf16.mxu0 0
    %1483 = vmatpush1.bf16.msra.mxu0 0
    %1484 = vmatprep.subr.bf16.mxu0 0
    %1485 = vmatpush1.bf16.msra.mxu0 0
    %1486 = vmatprep.subr.bf16.mxu0 0
    %1487 = vmatpush1.bf16.msra.mxu0 0
    %1488 = vmatprep.mubr.bf16.mxu0 0
    %1489 = vmatmul.mubr.bf16.gmra.mrb[0].mxu0 %v1384
    %v1490 = vpop.f32.mrb[0].mxu0
    %v1491 = vadd.f32 %v1406, %v1490
    %v1492 = vpop.f32.mrb[0].mxu0
    %v1493 = vpop.f32.mrb[0].mxu0
    %v1494 = vpop.f32.mrb[0].mxu0
    %1495 = vdwg.mxu0
    %v1496 = vmax.f32 %v1491, 0.0
    %v1497 = vpack.c.bf16 %v1496, %v1496
    %v1498 = vld [vmem:[%s11] sm:$0xf]
    %v1499 = vld [vmem:[%s11 + $0x4] sm:$0xf]
    %v1500 = vld [vmem:[%s11 + $0x8] sm:$0xf]
    %v1501 = vld [vmem:[%s11 + $0xc] sm:$0xf]
    %v1502 = vld [vmem:[%s11 + $0x10] sm:$0xf]
    %v1503 = vld [vmem:[%s11 + $0x14] sm:$0xf]
    %v1504 = vld [vmem:[%s11 + $0x18] sm:$0xf]
    %v1505 = vld [vmem:[%s11 + $0x1c] sm:$0xf]
    %v1506 = vld [vmem:[%s11 + $0x20] sm:$0xf]
    %v1507 = vld [vmem:[%s11 + $0x24] sm:$0xf]
    %v1508 = vld [vmem:[%s11 + $0x28] sm:$0xf]
    %v1509 = vld [vmem:[%s11 + $0x2c] sm:$0xf]
    %v1510 = vld [vmem:[%s11 + $0x30] sm:$0xf]
    %v1511 = vld [vmem:[%s11 + $0x34] sm:$0xf]
    %v1512 = vld [vmem:[%s11 + $0x38] sm:$0xf]
    %v1513 = vld [vmem:[%s11 + $0x3c] sm:$0xf]
    %v1514 = vld [vmem:[%s12] sm:$0x1]
    %v1516 = vlaneseq
    %v1517 = vshrl.u32 %v1516, 7
    %v1518 = vsub.s32 0, %v1517
    %v1519 = vrot.slane %v1514, %v1518
    %v1537 = vunpack.c.l.b16 %v1498
    %v1538 = vunpack.c.l.b16 %v1499
    %v1539 = vunpack.c.l.b16 %v1500
    %v1540 = vunpack.c.l.b16 %v1501
    %v1541 = vunpack.c.l.b16 %v1502
    %v1542 = vunpack.c.l.b16 %v1503
    %v1543 = vunpack.c.l.b16 %v1504
    %v1544 = vunpack.c.l.b16 %v1505
    %v1545 = vunpack.c.l.b16 %v1506
    %v1546 = vunpack.c.l.b16 %v1507
    %v1547 = vunpack.c.l.b16 %v1508
    %v1548 = vunpack.c.l.b16 %v1509
    %v1549 = vunpack.c.l.b16 %v1510
    %v1550 = vunpack.c.l.b16 %v1511
    %v1551 = vunpack.c.l.b16 %v1512
    %v1552 = vunpack.c.l.b16 %v1513
    %v1553 = vpack.c.b16 %v1538, %v1537
    %v1554 = vpack.c.b16 %v1540, %v1539
    %v1555 = vpack.c.b16 %v1542, %v1541
    %v1556 = vpack.c.b16 %v1544, %v1543
    %v1557 = vpack.c.b16 %v1546, %v1545
    %v1558 = vpack.c.b16 %v1548, %v1547
    %v1559 = vpack.c.b16 %v1550, %v1549
    %v1560 = vpack.c.b16 %v1552, %v1551
    %1569 = vmatprep.subr.bf16.mxu0 0
    %1570 = vmatpush1.bf16.msra.mxu0 %v1553
    %1571 = vmatprep.subr.bf16.mxu0 0
    %1572 = vmatpush1.bf16.msra.mxu0 %v1554
    %1573 = vmatprep.subr.bf16.mxu0 0
    %1574 = vmatpush1.bf16.msra.mxu0 %v1555
    %1575 = vmatprep.subr.bf16.mxu0 0
    %1576 = vmatpush1.bf16.msra.mxu0 %v1556
    %1577 = vmatprep.subr.bf16.mxu0 0
    %1578 = vmatpush1.bf16.msra.mxu0 %v1557
    %1579 = vmatprep.subr.bf16.mxu0 0
    %1580 = vmatpush1.bf16.msra.mxu0 %v1558
    %1581 = vmatprep.subr.bf16.mxu0 0
    %1582 = vmatpush1.bf16.msra.mxu0 %v1559
    %1583 = vmatprep.subr.bf16.mxu0 0
    %1584 = vmatpush1.bf16.msra.mxu0 %v1560
    %1585 = vmatprep.subr.bf16.mxu0 0
    %1586 = vmatpush1.bf16.msra.mxu0 0
    %1587 = vmatprep.subr.bf16.mxu0 0
    %1588 = vmatpush1.bf16.msra.mxu0 0
    %1589 = vmatprep.subr.bf16.mxu0 0
    %1590 = vmatpush1.bf16.msra.mxu0 0
    %1591 = vmatprep.subr.bf16.mxu0 0
    %1592 = vmatpush1.bf16.msra.mxu0 0
    %1593 = vmatprep.subr.bf16.mxu0 0
    %1594 = vmatpush1.bf16.msra.mxu0 0
    %1595 = vmatprep.subr.bf16.mxu0 0
    %1596 = vmatpush1.bf16.msra.mxu0 0
    %1597 = vmatprep.subr.bf16.mxu0 0
    %1598 = vmatpush1.bf16.msra.mxu0 0
    %1599 = vmatprep.subr.bf16.mxu0 0
    %1600 = vmatpush1.bf16.msra.mxu0 0
    %1601 = vmatprep.mubr.bf16.mxu0 0
    %1602 = vmatmul.mubr.bf16.gmra.mrb[0].mxu0 %v1497
    %v1603 = vpop.f32.mrb[0].mxu0
    %v1604 = vadd.f32 %v1519, %v1603
    %v1605 = vpop.f32.mrb[0].mxu0
    %v1606 = vpop.f32.mrb[0].mxu0
    %v1607 = vpop.f32.mrb[0].mxu0
    %1608 = vdwg.mxu0
    %vm1609 = vcmask 15360
    %1610 = vst.msk [vmem:[%s13] sm:$0xff] %vm1609, %v1604
    // Predicated region
    $region74: #{mlp_forward.1} parent=1 // pred_check
      _
    $region75: #{mlp_forward.1} parent=1 // pred_check_branch
      %1612 = sbr.rel (0) target = $region77
    $region76: #{mlp_forward.1} parent=1 // pred_region
      _
    $region77: #{mlp_forward.1} parent=1 // pred_fallthru
      _
    // Predicated region
    $region78: #{mlp_forward.1} parent=1 // pred_check
      _
    $region79: #{mlp_forward.1} parent=1 // pred_check_branch
      %1614 = sbr.rel (0) target = $region81
    $region80: #{mlp_forward.1} parent=1 // pred_region
      _
    $region81: #{mlp_forward.1} parent=1 // pred_fallthru
      _
    %1615 = vsyncpa [#allocation3], 1
    %1616 = vsyncpa [#allocation5], 1
    %1617 = vsyncpa [#allocation8], 1

</llo_original>
